<compile_context>
chip_gen: v6e
topology: v6e:2x2x1
jax: 0.10.0
libtpu: 0.0.40
codegen_flags: <defaults>
</compile_context>

<pallas_src>
import functools

import jax
import jax.numpy as jnp
from jax.experimental import pallas as pl
from jax.experimental.pallas import tpu as pltpu

HIDDEN = 512
LANE = 128
MAX_TILE_B = 1024  # ~16-18 MB peak VMEM at this tile; safe on v5e/v6e/v7x


def _round_up(x, m):
    return -(-x // m) * m


def _ffdqn_kernel(
    actions_n,
    x_ref,              # (TILE_B, K_PAD)  bf16
    w1_ref, b1_ref,     # (K_PAD, 1024) bf16, (1, 1024) f32   fused [value || adv] layer 1
    w2v_ref, b2v_ref,   # (512, 512) bf16, (1, 512) f32
    w2a_ref, b2a_ref,   # (512, 512) bf16, (1, 512) f32
    w3v_ref,            # (512, 128) bf16 : value head -> lane `actions_n`
    w3a_ref,            # (512, 128) bf16 : advantage head -> lanes 0..actions_n-1
    b3_ref,             # (1, 128)   f32
    out_ref,            # (TILE_B, 128) f32, lane-dense; wrapper slices [:, :actions_n]
):
    x = x_ref[...]

    # ---- fused layer 1 (value || advantage), f32 accumulation on the MXU ----
    h1 = jnp.dot(x, w1_ref[...], preferred_element_type=jnp.float32) + b1_ref[...]
    h1 = jnp.maximum(h1, 0.0)                        # (TILE_B, 1024) f32

    hv = h1[:, :HIDDEN].astype(jnp.bfloat16)         # lane-aligned slices
    ha = h1[:, HIDDEN:].astype(jnp.bfloat16)

    # ---- layer 2, per stream ----
    h2v = jnp.dot(hv, w2v_ref[...], preferred_element_type=jnp.float32) + b2v_ref[...]
    h2v = jnp.maximum(h2v, 0.0)
    h2a = jnp.dot(ha, w2a_ref[...], preferred_element_type=jnp.float32) + b2a_ref[...]
    h2a = jnp.maximum(h2a, 0.0)

    # ---- lane-padded head, no concat: two (TILE_B,512)x(512,128) MXU pushes ----
    # head lanes: [0..A-1] = advantage, [A] = value, [A+1..127] = exact zeros.
    head = (
        jnp.dot(h2v.astype(jnp.bfloat16), w3v_ref[...], preferred_element_type=jnp.float32)
        + jnp.dot(h2a.astype(jnp.bfloat16), w3a_ref[...], preferred_element_type=jnp.float32)
        + b3_ref[...]
    )

    # ---- dueling combine, kept 128-lane-dense for an unmasked store ----
    val = head[:, actions_n:actions_n + 1]                    # (TILE_B, 1)
    adv_sum = jnp.sum(head, axis=1, keepdims=True) - val      # pad lanes are exactly 0
    adv_mean = adv_sum * (1.0 / actions_n)
    # lanes 0..A-1 hold Q = adv + val - adv_mean; lanes >= A are don't-care (sliced off)
    out_ref[...] = (head + (val - adv_mean)).astype(out_ref.dtype)


def prepare_params(params, obs_len, actions_n):
    """Fuse / pad / bf16-cast PyTorch-shaped params once (do NOT redo this per call)."""
    assert actions_n < LANE, "head layout needs actions_n + 1 <= 128"
    k_pad = _round_up(max(obs_len, 1), LANE)

    # fused layer 1: [value || advantage], rows zero-padded to K_PAD
    w1 = jnp.concatenate([params["w1v"], params["w1a"]], axis=1)          # (obs, 1024)
    w1 = jnp.pad(w1, ((0, k_pad - obs_len), (0, 0))).astype(jnp.bfloat16)
    b1 = jnp.concatenate([params["b1v"], params["b1a"]], axis=1).astype(jnp.float32)

    w2v = params["w2v"].astype(jnp.bfloat16)
    b2v = params["b2v"].astype(jnp.float32)
    w2a = params["w2a"].astype(jnp.bfloat16)
    b2a = params["b2a"].astype(jnp.float32)

    # Pre-split, lane-padded head (no in-kernel concat): value weights feed lane
    # `actions_n`, advantage weights feed lanes 0..actions_n-1, all other lanes zero.
    w3v = jnp.zeros((HIDDEN, LANE), jnp.float32)
    w3v = w3v.at[:, actions_n:actions_n + 1].set(params["w3v"])
    w3a = jnp.zeros((HIDDEN, LANE), jnp.float32)
    w3a = w3a.at[:, :actions_n].set(params["w3a"])
    b3 = jnp.zeros((1, LANE), jnp.float32)
    b3 = b3.at[:, :actions_n].set(params["b3a"])
    b3 = b3.at[:, actions_n:actions_n + 1].set(params["b3v"])

    # TODO(synk): optional low-precision weights: int8 (per-out-channel scales) on
    # v5e/v6e, fp8 e4m3 on v7x, to halve weight DMA in the small-batch regime.
    return dict(
        w1=w1, b1=b1, w2v=w2v, b2v=b2v, w2a=w2a, b2a=b2a,
        w3v=w3v.astype(jnp.bfloat16), w3a=w3a.astype(jnp.bfloat16), b3=b3,
    )


def _choose_tile_b(batch):
    """Multiple-of-8 batch tile.  Small batches: one tile.  batch > 256: guarantee
    >= 2 grid steps (so v7x's second TensorCore engages) and minimize padding waste."""
    if batch <= 256:
        return _round_up(batch, 8)
    cap = min(MAX_TILE_B, _round_up(pl.cdiv(batch, 2), 8))
    best_t, best_waste = cap, _round_up(batch, cap) - batch
    for t in range(cap, 127, -8):
        waste = _round_up(batch, t) - batch
        if waste < best_waste:
            best_t, best_waste = t, waste
            if waste == 0:
                break
    return best_t


def simple_ffdqn_forward(x, fused_params, actions_n):
    """x: (batch, obs_len) float32. fused_params: output of prepare_params."""
    batch, obs_len = x.shape
    k_pad = fused_params["w1"].shape[0]

    tile_b = _choose_tile_b(batch)
    padded_b = _round_up(batch, tile_b)

    x_p = x
    if padded_b != batch or k_pad != obs_len:
        x_p = jnp.pad(x, ((0, padded_b - batch), (0, k_pad - obs_len)))
    x_p = x_p.astype(jnp.bfloat16)

    fp = fused_params
    args = (x_p, fp["w1"], fp["b1"], fp["w2v"], fp["b2v"],
            fp["w2a"], fp["b2a"], fp["w3v"], fp["w3a"], fp["b3"])

    # x / out are tiled over the batch grid; every weight maps to block (0, 0) so it
    # is DMA'd once and stays VMEM-resident across all grid steps.
    # TODO(synk): sweep pipeline_mode=pl.Buffered(1) on the constant-index weight
    # specs to reclaim their double-buffer VMEM (mostly matters under v7x's 64 MiB).
    in_specs = [pl.BlockSpec((tile_b, k_pad), lambda i: (i, 0))] + [
        pl.BlockSpec(a.shape, lambda i: (0, 0)) for a in args[1:]
    ]
    # Lane-dense output block (last dim = 128): unmasked vst + dense HBM writeback.
    out_spec = pl.BlockSpec((tile_b, LANE), lambda i: (i, 0))

    # TODO(synk): for repeated per-env-step acting, keep weights resident across
    # pallas_calls (cross-call prefetch: start the weight DMA in a setup call and
    # return SEMAPHORE/VMEM-ref outputs) instead of re-DMAing ~1.5 MB per call.
    out = pl.pallas_call(
        functools.partial(_ffdqn_kernel, actions_n),
        out_shape=jax.ShapeDtypeStruct((padded_b, LANE), jnp.float32),
        grid=(padded_b // tile_b,),
        in_specs=in_specs,
        out_specs=out_spec,
        compiler_params=pltpu.CompilerParams(
            dimension_semantics=("parallel",),   # shard batch tiles across v7x's 2 TCs
            vmem_limit_bytes=32 * 1024 * 1024,
        ),
    )(*args)

    return out[:batch, :actions_n]


def init_params(key, obs_len, actions_n):
    """Deterministic synthetic parameters (PyTorch-Linear-shaped, stored as (in, out))."""
    def linear(key, fan_in, fan_out):
        kw, kb = jax.random.split(key)
        bound = 1.0 / jnp.sqrt(float(fan_in))
        w = jax.random.uniform(kw, (fan_in, fan_out), jnp.float32, -bound, bound)
        b = jax.random.uniform(kb, (1, fan_out), jnp.float32, -bound, bound)
        return w, b

    keys = jax.random.split(key, 6)
    w1v, b1v = linear(keys[0], obs_len, HIDDEN)
    w2v, b2v = linear(keys[1], HIDDEN, HIDDEN)
    w3v, b3v = linear(keys[2], HIDDEN, 1)
    w1a, b1a = linear(keys[3], obs_len, HIDDEN)
    w2a, b2a = linear(keys[4], HIDDEN, HIDDEN)
    w3a, b3a = linear(keys[5], HIDDEN, actions_n)
    return dict(
        w1v=w1v, b1v=b1v, w2v=w2v, b2v=b2v, w3v=w3v, b3v=b3v,
        w1a=w1a, b1a=b1a, w2a=w2a, b2a=b2a, w3a=w3a, b3a=b3a,
    )


def reference_forward_f32(x, p):
    """Pure-JAX f32 reference matching the PyTorch module semantics."""
    hv = jax.nn.relu(x @ p["w1v"] + p["b1v"])
    hv = jax.nn.relu(hv @ p["w2v"] + p["b2v"])
    val = hv @ p["w3v"] + p["b3v"]
    ha = jax.nn.relu(x @ p["w1a"] + p["b1a"])
    ha = jax.nn.relu(ha @ p["w2a"] + p["b2a"])
    adv = ha @ p["w3a"] + p["b3a"]
    return val + adv - adv.mean(axis=1, keepdims=True)


def reference_forward_bf16(x, p):
    """Reference with the same bf16-inputs / f32-accumulation recipe as the kernel."""
    def lin(a, w, b):
        return jnp.dot(a.astype(jnp.bfloat16), w.astype(jnp.bfloat16),
                       preferred_element_type=jnp.float32) + b
    hv = jax.nn.relu(lin(x, p["w1v"], p["b1v"]))
    hv = jax.nn.relu(lin(hv, p["w2v"], p["b2v"]))
    val = lin(hv, p["w3v"], p["b3v"])
    ha = jax.nn.relu(lin(x, p["w1a"], p["b1a"]))
    ha = jax.nn.relu(lin(ha, p["w2a"], p["b2a"]))
    adv = lin(ha, p["w3a"], p["b3a"])
    return val + adv - adv.mean(axis=1, keepdims=True)


if __name__ == "__main__":
    obs_len, actions_n = 32, 8

    key = jax.random.PRNGKey(0)
    kx, kp, kx2 = jax.random.split(key, 3)
    params = init_params(kp, obs_len, actions_n)
    fused = prepare_params(params, obs_len, actions_n)

    # --- small-batch (acting regime): single tile, 1-step grid ---
    batch = 8
    x = jax.random.normal(kx, (batch, obs_len), jnp.float32)
    out = jax.block_until_ready(simple_ffdqn_forward(x, fused, actions_n))
    assert out.shape == (batch, actions_n)

    ref_bf16 = reference_forward_bf16(x, params)
    assert jnp.allclose(out, ref_bf16, atol=2e-3, rtol=2e-3), "mismatch vs bf16 reference"
    ref_f32 = reference_forward_f32(x, params)
    assert jnp.allclose(out, ref_f32, atol=5e-2, rtol=5e-2), "mismatch vs f32 reference"

    # --- mid-size batch: exercises >=2 grid steps (megacore path) + batch padding ---
    batch2 = 300
    x2 = jax.random.normal(kx2, (batch2, obs_len), jnp.float32)
    out2 = jax.block_until_ready(simple_ffdqn_forward(x2, fused, actions_n))
    assert out2.shape == (batch2, actions_n)
    ref2 = reference_forward_bf16(x2, params)
    assert jnp.allclose(out2, ref2, atol=2e-3, rtol=2e-3), "mismatch vs bf16 reference (tiled)"

    print("KERNEL_OK")
</pallas_src>

<mosaic_0001>
module attributes {stable_mosaic.version = 11 : i64} {
  func.func @_ffdqn_kernel(%arg0: i32, %arg1: memref<8x128xbf16, #tpu.memory_space<vmem>>, %arg2: memref<128x1024xbf16, #tpu.memory_space<vmem>>, %arg3: memref<1x1024xf32, #tpu.memory_space<vmem>>, %arg4: memref<512x512xbf16, #tpu.memory_space<vmem>>, %arg5: memref<1x512xf32, #tpu.memory_space<vmem>>, %arg6: memref<512x512xbf16, #tpu.memory_space<vmem>>, %arg7: memref<1x512xf32, #tpu.memory_space<vmem>>, %arg8: memref<512x128xbf16, #tpu.memory_space<vmem>>, %arg9: memref<512x128xbf16, #tpu.memory_space<vmem>>, %arg10: memref<1x128xf32, #tpu.memory_space<vmem>>, %arg11: memref<8x128xf32, #tpu.memory_space<vmem>>) attributes {dimension_semantics = [#tpu.dimension_semantics<parallel>], iteration_bounds = array<i64: 1>, scalar_prefetch = 0 : i64, scratch_operands = 0 : i64, tpu.core_type = #tpu.core_type<tc>, window_params = [{transform_indices = @transform_0, window_bounds = array<i64: 8, 128>}, {pipeline_mode = #tpu.pipeline_mode<synchronous>, transform_indices = @transform_1, window_bounds = array<i64: 128, 1024>}, {pipeline_mode = #tpu.pipeline_mode<synchronous>, transform_indices = @transform_2, window_bounds = array<i64: 1, 1024>}, {pipeline_mode = #tpu.pipeline_mode<synchronous>, transform_indices = @transform_3, window_bounds = array<i64: 512, 512>}, {pipeline_mode = #tpu.pipeline_mode<synchronous>, transform_indices = @transform_4, window_bounds = array<i64: 1, 512>}, {pipeline_mode = #tpu.pipeline_mode<synchronous>, transform_indices = @transform_5, window_bounds = array<i64: 512, 512>}, {pipeline_mode = #tpu.pipeline_mode<synchronous>, transform_indices = @transform_6, window_bounds = array<i64: 1, 512>}, {pipeline_mode = #tpu.pipeline_mode<synchronous>, transform_indices = @transform_7, window_bounds = array<i64: 512, 128>}, {pipeline_mode = #tpu.pipeline_mode<synchronous>, transform_indices = @transform_8, window_bounds = array<i64: 512, 128>}, {pipeline_mode = #tpu.pipeline_mode<synchronous>, transform_indices = @transform_9, window_bounds = array<i64: 1, 128>}, {transform_indices = @transform_10, window_bounds = array<i64: 8, 128>}]} {
    %c0 = arith.constant 0 : index
    %c0_0 = arith.constant 0 : index
    %0 = vector.load %arg1[%c0, %c0_0] : memref<8x128xbf16, #tpu.memory_space<vmem>>, vector<8x128xbf16>
    %c0_1 = arith.constant 0 : index
    %c0_2 = arith.constant 0 : index
    %1 = vector.load %arg2[%c0_1, %c0_2] : memref<128x1024xbf16, #tpu.memory_space<vmem>>, vector<128x1024xbf16>
    %cst = arith.constant dense<0.000000e+00> : vector<8x1024xf32>
    %2 = tpu.matmul %0, %1, %cst {dimension_numbers = #tpu.dot_dimension_numbers<[1], [0], [0], [1], [0, 0, 1, 1], [], []>} : vector<8x128xbf16>, vector<128x1024xbf16>, vector<8x1024xf32> -> vector<8x1024xf32>
    %c0_3 = arith.constant 0 : index
    %c0_4 = arith.constant 0 : index
    %3 = vector.load %arg3[%c0_3, %c0_4] : memref<1x1024xf32, #tpu.memory_space<vmem>>, vector<1x1024xf32>
    %4 = vector.broadcast %3 : vector<1x1024xf32> to vector<8x1024xf32>
    %5 = arith.addf %2, %4 : vector<8x1024xf32>
    %cst_5 = arith.constant 0.000000e+00 : f32
    %6 = vector.broadcast %cst_5 : f32 to vector<8x1024xf32>
    %7 = arith.maximumf %5, %6 : vector<8x1024xf32>
    %8 = vector.extract_strided_slice %7 {offsets = [0, 0], sizes = [8, 512], strides = [1, 1]} : vector<8x1024xf32> to vector<8x512xf32>
    %9 = arith.truncf %8 : vector<8x512xf32> to vector<8x512xbf16>
    %10 = vector.extract_strided_slice %7 {offsets = [0, 512], sizes = [8, 512], strides = [1, 1]} : vector<8x1024xf32> to vector<8x512xf32>
    %11 = arith.truncf %10 : vector<8x512xf32> to vector<8x512xbf16>
    %c0_6 = arith.constant 0 : index
    %c0_7 = arith.constant 0 : index
    %12 = vector.load %arg4[%c0_6, %c0_7] : memref<512x512xbf16, #tpu.memory_space<vmem>>, vector<512x512xbf16>
    %cst_8 = arith.constant dense<0.000000e+00> : vector<8x512xf32>
    %13 = tpu.matmul %9, %12, %cst_8 {dimension_numbers = #tpu.dot_dimension_numbers<[1], [0], [0], [1], [0, 0, 1, 1], [], []>} : vector<8x512xbf16>, vector<512x512xbf16>, vector<8x512xf32> -> vector<8x512xf32>
    %c0_9 = arith.constant 0 : index
    %c0_10 = arith.constant 0 : index
    %14 = vector.load %arg5[%c0_9, %c0_10] : memref<1x512xf32, #tpu.memory_space<vmem>>, vector<1x512xf32>
    %15 = vector.broadcast %14 : vector<1x512xf32> to vector<8x512xf32>
    %16 = arith.addf %13, %15 : vector<8x512xf32>
    %cst_11 = arith.constant 0.000000e+00 : f32
    %17 = vector.broadcast %cst_11 : f32 to vector<8x512xf32>
    %18 = arith.maximumf %16, %17 : vector<8x512xf32>
    %c0_12 = arith.constant 0 : index
    %c0_13 = arith.constant 0 : index
    %19 = vector.load %arg6[%c0_12, %c0_13] : memref<512x512xbf16, #tpu.memory_space<vmem>>, vector<512x512xbf16>
    %cst_14 = arith.constant dense<0.000000e+00> : vector<8x512xf32>
    %20 = tpu.matmul %11, %19, %cst_14 {dimension_numbers = #tpu.dot_dimension_numbers<[1], [0], [0], [1], [0, 0, 1, 1], [], []>} : vector<8x512xbf16>, vector<512x512xbf16>, vector<8x512xf32> -> vector<8x512xf32>
    %c0_15 = arith.constant 0 : index
    %c0_16 = arith.constant 0 : index
    %21 = vector.load %arg7[%c0_15, %c0_16] : memref<1x512xf32, #tpu.memory_space<vmem>>, vector<1x512xf32>
    %22 = vector.broadcast %21 : vector<1x512xf32> to vector<8x512xf32>
    %23 = arith.addf %20, %22 : vector<8x512xf32>
    %cst_17 = arith.constant 0.000000e+00 : f32
    %24 = vector.broadcast %cst_17 : f32 to vector<8x512xf32>
    %25 = arith.maximumf %23, %24 : vector<8x512xf32>
    %26 = arith.truncf %18 : vector<8x512xf32> to vector<8x512xbf16>
    %c0_18 = arith.constant 0 : index
    %c0_19 = arith.constant 0 : index
    %27 = vector.load %arg8[%c0_18, %c0_19] : memref<512x128xbf16, #tpu.memory_space<vmem>>, vector<512x128xbf16>
    %cst_20 = arith.constant dense<0.000000e+00> : vector<8x128xf32>
    %28 = tpu.matmul %26, %27, %cst_20 {dimension_numbers = #tpu.dot_dimension_numbers<[1], [0], [0], [1], [0, 0, 1, 1], [], []>} : vector<8x512xbf16>, vector<512x128xbf16>, vector<8x128xf32> -> vector<8x128xf32>
    %29 = arith.truncf %25 : vector<8x512xf32> to vector<8x512xbf16>
    %c0_21 = arith.constant 0 : index
    %c0_22 = arith.constant 0 : index
    %30 = vector.load %arg9[%c0_21, %c0_22] : memref<512x128xbf16, #tpu.memory_space<vmem>>, vector<512x128xbf16>
    %cst_23 = arith.constant dense<0.000000e+00> : vector<8x128xf32>
    %31 = tpu.matmul %29, %30, %cst_23 {dimension_numbers = #tpu.dot_dimension_numbers<[1], [0], [0], [1], [0, 0, 1, 1], [], []>} : vector<8x512xbf16>, vector<512x128xbf16>, vector<8x128xf32> -> vector<8x128xf32>
    %32 = arith.addf %28, %31 : vector<8x128xf32>
    %c0_24 = arith.constant 0 : index
    %c0_25 = arith.constant 0 : index
    %33 = vector.load %arg10[%c0_24, %c0_25] : memref<1x128xf32, #tpu.memory_space<vmem>>, vector<1x128xf32>
    %34 = vector.broadcast %33 : vector<1x128xf32> to vector<8x128xf32>
    %35 = arith.addf %32, %34 : vector<8x128xf32>
    %36 = vector.extract_strided_slice %35 {offsets = [0, 8], sizes = [8, 1], strides = [1, 1]} : vector<8x128xf32> to vector<8x1xf32>
    %cst_26 = arith.constant dense<0.000000e+00> : vector<8xf32>
    %37 = vector.multi_reduction <add>, %35, %cst_26 [1] : vector<8x128xf32> to vector<8xf32>
    %38 = vector.shape_cast %37 : vector<8xf32> to vector<8x1xf32>
    %39 = arith.subf %38, %36 : vector<8x1xf32>
    %cst_27 = arith.constant 1.250000e-01 : f32
    %40 = vector.broadcast %cst_27 : f32 to vector<8x1xf32>
    %41 = arith.mulf %39, %40 : vector<8x1xf32>
    %42 = arith.subf %36, %41 : vector<8x1xf32>
    %43 = vector.broadcast %42 : vector<8x1xf32> to vector<8x128xf32>
    %44 = arith.addf %35, %43 : vector<8x128xf32>
    %c0_28 = arith.constant 0 : index
    %c0_29 = arith.constant 0 : index
    %45 = vector.load %arg11[%c0_28, %c0_29] : memref<8x128xf32, #tpu.memory_space<vmem>>, vector<8x128xf32>
    tpu.vector_store %arg11[%c0_28, %c0_29], %44 {strides = array<i32>} : memref<8x128xf32, #tpu.memory_space<vmem>>, vector<8x128xf32>,
    return
  }
  func.func @transform_0(%arg0: i32) -> (i32, i32) {
    %c0_i32 = arith.constant 0 : i32
    %c0_i32_0 = arith.constant 0 : i32
    return %arg0, %c0_i32 : i32, i32
  }
  func.func @transform_1(%arg0: i32) -> (i32, i32) {
    %c0_i32 = arith.constant 0 : i32
    %c0_i32_0 = arith.constant 0 : i32
    %c0_i32_1 = arith.constant 0 : i32
    return %c0_i32, %c0_i32_0 : i32, i32
  }
  func.func @transform_2(%arg0: i32) -> (i32, i32) {
    %c0_i32 = arith.constant 0 : i32
    %c0_i32_0 = arith.constant 0 : i32
    %c0_i32_1 = arith.constant 0 : i32
    return %c0_i32, %c0_i32_0 : i32, i32
  }
  func.func @transform_3(%arg0: i32) -> (i32, i32) {
    %c0_i32 = arith.constant 0 : i32
    %c0_i32_0 = arith.constant 0 : i32
    %c0_i32_1 = arith.constant 0 : i32
    return %c0_i32, %c0_i32_0 : i32, i32
  }
  func.func @transform_4(%arg0: i32) -> (i32, i32) {
    %c0_i32 = arith.constant 0 : i32
    %c0_i32_0 = arith.constant 0 : i32
    %c0_i32_1 = arith.constant 0 : i32
    return %c0_i32, %c0_i32_0 : i32, i32
  }
  func.func @transform_5(%arg0: i32) -> (i32, i32) {
    %c0_i32 = arith.constant 0 : i32
    %c0_i32_0 = arith.constant 0 : i32
    %c0_i32_1 = arith.constant 0 : i32
    return %c0_i32, %c0_i32_0 : i32, i32
  }
  func.func @transform_6(%arg0: i32) -> (i32, i32) {
    %c0_i32 = arith.constant 0 : i32
    %c0_i32_0 = arith.constant 0 : i32
    %c0_i32_1 = arith.constant 0 : i32
    return %c0_i32, %c0_i32_0 : i32, i32
  }
  func.func @transform_7(%arg0: i32) -> (i32, i32) {
    %c0_i32 = arith.constant 0 : i32
    %c0_i32_0 = arith.constant 0 : i32
    %c0_i32_1 = arith.constant 0 : i32
    return %c0_i32, %c0_i32_0 : i32, i32
  }
  func.func @transform_8(%arg0: i32) -> (i32, i32) {
    %c0_i32 = arith.constant 0 : i32
    %c0_i32_0 = arith.constant 0 : i32
    %c0_i32_1 = arith.constant 0 : i32
    return %c0_i32, %c0_i32_0 : i32, i32
  }
  func.func @transform_9(%arg0: i32) -> (i32, i32) {
    %c0_i32 = arith.constant 0 : i32
    %c0_i32_0 = arith.constant 0 : i32
    %c0_i32_1 = arith.constant 0 : i32
    return %c0_i32, %c0_i32_0 : i32, i32
  }
  func.func @transform_10(%arg0: i32) -> (i32, i32) {
    %c0_i32 = arith.constant 0 : i32
    %c0_i32_0 = arith.constant 0 : i32
    return %arg0, %c0_i32 : i32, i32
  }
}

</mosaic_0001>

<llo_original>
// kernel: tpu_custom_call.1
$region0: #{tpu_custom_call.1}
  #allocation0 [shape = 'u32[]', space=smem, size = 0x4, offset = 0x4, fixed_abs, tag = 'smem constant byte address 0x4 - core index']
  #allocation1 [shape = 'u32[144,128]{1,0:T(1,128)}', space=vmem, size = 0x12000, scoped, tag = 'internal scratch']
  %s0 = inlined_call_operand.hbm [shape: bf16[8,128], index: 0, kind: input, shape index: {}]
  %s1 = inlined_call_operand.hbm [shape: bf16[128,1024], index: 1, kind: input, shape index: {}]
  %s2 = inlined_call_operand.hbm [shape: f32[1,1024], index: 2, kind: input, shape index: {}]
  %s3 = inlined_call_operand.hbm [shape: bf16[512,512], index: 3, kind: input, shape index: {}]
  %s4 = inlined_call_operand.vmem [shape: f32[1,512], index: 4, kind: input, shape index: {}]
  %s5 = inlined_call_operand.hbm [shape: bf16[512,512], index: 5, kind: input, shape index: {}]
  %s6 = inlined_call_operand.vmem [shape: f32[1,512], index: 6, kind: input, shape index: {}]
  %s7 = inlined_call_operand.hbm [shape: bf16[512,128], index: 7, kind: input, shape index: {}]
  %s8 = inlined_call_operand.hbm [shape: bf16[512,128], index: 8, kind: input, shape index: {}]
  %s9 = inlined_call_operand.vmem [shape: f32[1,128], index: 9, kind: input, shape index: {}]
  %s10 = inlined_call_operand.hbm [shape: f32[8,128], index: 10, kind: output, shape index: {}]
  %s11 = sld [smem:[#allocation0]]
  $region78: #{tpu_custom_call.1} parent=0
    _
  %s13 = ssub.s32 1, %s11
  %s14 = scalar_select 0, %s13, %s11
  $region1: #{tpu_custom_call.1} parent=0
    #allocation2 [shape = 'u8[2048]{0}', space=vmem, size = 0x800, scoped, tag = 'input window, operand 0, single buffered']
    #allocation3 [shape = 's32[1]{0}', space=sflag, size = 0x4, scoped, tag = 'scoped memory for tpu_custom_call.1']
    #allocation4 [shape = 's32[1]{0}', space=sflag, size = 0x4, scoped, tag = 'scoped memory for tpu_custom_call.1']
    #allocation5 [shape = 'u8[262144]{0}', space=vmem, size = 0x40000, scoped, tag = 'input window, operand 1, single buffered']
    #allocation6 [shape = 's32[1]{0}', space=sflag, size = 0x4, scoped, tag = 'scoped memory for tpu_custom_call.1']
    #allocation7 [shape = 'u8[4096]{0}', space=vmem, size = 0x1000, scoped, tag = 'input window, operand 2, single buffered']
    #allocation8 [shape = 'u8[524288]{0}', space=vmem, size = 0x80000, scoped, tag = 'input window, operand 3, single buffered']
    #allocation9 [shape = 's32[1]{0}', space=sflag, size = 0x4, scoped, tag = 'scoped memory for tpu_custom_call.1']
    #allocation10 [shape = 'u8[524288]{0}', space=vmem, size = 0x80000, scoped, tag = 'input window, operand 5, single buffered']
    #allocation11 [shape = 'u8[131072]{0}', space=vmem, size = 0x20000, scoped, tag = 'input window, operand 7, single buffered']
    #allocation12 [shape = 's32[1]{0}', space=sflag, size = 0x4, scoped, tag = 'scoped memory for tpu_custom_call.1']
    #allocation13 [shape = 'u8[131072]{0}', space=vmem, size = 0x20000, scoped, tag = 'input window, operand 8, single buffered']
    #allocation14 [shape = 'u8[4096]{0}', space=vmem, size = 0x1000, scoped, tag = 'output window, operand 0, single buffered']
    %15 = vsyncpa [#allocation3], 0
    %16 = vsyncpa [#allocation6], 0
    %17 = vsyncpa [#allocation9], 0
    %18 = vsyncpa [#allocation12], 0
    %19 = vsyncpa [#allocation4], 0
    // Predicated region
    $region2: #{tpu_custom_call.1} parent=1 // pred_check
      _
    $region3: #{tpu_custom_call.1} parent=1 // pred_check_branch
      %21 = sbr.rel (0) target = $region5
    $region4: #{tpu_custom_call.1} parent=1 // pred_region
      %s23 = ssub.s32 64, 64
      %24 = vsyncadd [#allocation3], %s23
      %s26 = sshll.u32 [#allocation2], 4
      %s27 = int_to_ptr.vmem [resolvable:$true] %s26
      %29 = dma.hbm_to_vmem [thread:$0]  %s0, 64, %s27, [#allocation3]
    $region5: #{tpu_custom_call.1} parent=1 // pred_fallthru
      _
    // Predicated region
    $region6: #{tpu_custom_call.1} parent=1 // pred_check
      _
    $region7: #{tpu_custom_call.1} parent=1 // pred_check_branch
      %31 = sbr.rel (0) target = $region9
    $region8: #{tpu_custom_call.1} parent=1 // pred_region
      %s33 = ssub.s32 8192, 8192
      %34 = vsyncadd [#allocation6], %s33
      %s35 = sshll.u32 [#allocation5], 4
      %s36 = int_to_ptr.vmem [resolvable:$true] %s35
      %41 = dma.hbm_to_vmem [thread:$0]  %s1, 8192, %s36, [#allocation6], 512, 512, 32
    $region9: #{tpu_custom_call.1} parent=1 // pred_fallthru
      _
    // Predicated region
    $region10: #{tpu_custom_call.1} parent=1 // pred_check
      _
    $region11: #{tpu_custom_call.1} parent=1 // pred_check_branch
      %43 = sbr.rel (0) target = $region13
    $region12: #{tpu_custom_call.1} parent=1 // pred_region
      %s45 = ssub.s32 128, 128
      %46 = vsyncadd [#allocation6], %s45
      %s48 = sshll.u32 [#allocation7], 4
      %s49 = int_to_ptr.vmem [resolvable:$true] %s48
      %51 = dma.hbm_to_vmem [thread:$0]  %s2, 128, %s49, [#allocation6]
    $region13: #{tpu_custom_call.1} parent=1 // pred_fallthru
      _
    // Predicated region
    $region14: #{tpu_custom_call.1} parent=1 // pred_check
      _
    $region15: #{tpu_custom_call.1} parent=1 // pred_check_branch
      %53 = sbr.rel (0) target = $region17
    $region16: #{tpu_custom_call.1} parent=1 // pred_region
      %s55 = ssub.s32 16384, 16384
      %56 = vsyncadd [#allocation9], %s55
      %s57 = sshll.u32 [#allocation8], 4
      %s58 = int_to_ptr.vmem [resolvable:$true] %s57
      %63 = dma.hbm_to_vmem [thread:$0]  %s3, 16384, %s58, [#allocation9], 256, 256, 16
    $region17: #{tpu_custom_call.1} parent=1 // pred_fallthru
      _
    // Predicated region
    $region18: #{tpu_custom_call.1} parent=1 // pred_check
      _
    $region19: #{tpu_custom_call.1} parent=1 // pred_check_branch
      %65 = sbr.rel (0) target = $region21
    $region20: #{tpu_custom_call.1} parent=1 // pred_region
      _
    $region21: #{tpu_custom_call.1} parent=1 // pred_fallthru
      _
    // Predicated region
    $region22: #{tpu_custom_call.1} parent=1 // pred_check
      _
    $region23: #{tpu_custom_call.1} parent=1 // pred_check_branch
      %67 = sbr.rel (0) target = $region25
    $region24: #{tpu_custom_call.1} parent=1 // pred_region
      %s69 = ssub.s32 16384, 16384
      %70 = vsyncadd [#allocation9], %s69
      %s71 = sshll.u32 [#allocation10], 4
      %s72 = int_to_ptr.vmem [resolvable:$true] %s71
      %77 = dma.hbm_to_vmem [thread:$0]  %s5, 16384, %s72, [#allocation9], 256, 256, 16
    $region25: #{tpu_custom_call.1} parent=1 // pred_fallthru
      _
    // Predicated region
    $region26: #{tpu_custom_call.1} parent=1 // pred_check
      _
    $region27: #{tpu_custom_call.1} parent=1 // pred_check_branch
      %79 = sbr.rel (0) target = $region29
    $region28: #{tpu_custom_call.1} parent=1 // pred_region
      _
    $region29: #{tpu_custom_call.1} parent=1 // pred_fallthru
      _
    // Predicated region
    $region30: #{tpu_custom_call.1} parent=1 // pred_check
      _
    $region31: #{tpu_custom_call.1} parent=1 // pred_check_branch
      %81 = sbr.rel (0) target = $region33
    $region32: #{tpu_custom_call.1} parent=1 // pred_region
      %s83 = ssub.s32 4096, 4096
      %84 = vsyncadd [#allocation12], %s83
      %s85 = sshll.u32 [#allocation11], 4
      %s86 = int_to_ptr.vmem [resolvable:$true] %s85
      %91 = dma.hbm_to_vmem [thread:$0]  %s7, 4096, %s86, [#allocation12], 64, 64, 4
    $region33: #{tpu_custom_call.1} parent=1 // pred_fallthru
      _
    // Predicated region
    $region34: #{tpu_custom_call.1} parent=1 // pred_check
      _
    $region35: #{tpu_custom_call.1} parent=1 // pred_check_branch
      %93 = sbr.rel (0) target = $region37
    $region36: #{tpu_custom_call.1} parent=1 // pred_region
      %s95 = ssub.s32 4096, 4096
      %96 = vsyncadd [#allocation12], %s95
      %s97 = sshll.u32 [#allocation13], 4
      %s98 = int_to_ptr.vmem [resolvable:$true] %s97
      %103 = dma.hbm_to_vmem [thread:$0]  %s8, 4096, %s98, [#allocation12], 64, 64, 4
    $region37: #{tpu_custom_call.1} parent=1 // pred_fallthru
      _
    // Predicated region
    $region38: #{tpu_custom_call.1} parent=1 // pred_check
      _
    $region39: #{tpu_custom_call.1} parent=1 // pred_check_branch
      %105 = sbr.rel (0) target = $region41
    $region40: #{tpu_custom_call.1} parent=1 // pred_region
      _
    $region41: #{tpu_custom_call.1} parent=1 // pred_fallthru
      _
    // Predicated region
    $region42: #{tpu_custom_call.1} parent=1 // pred_check
      _
    $region43: #{tpu_custom_call.1} parent=1 // pred_check_branch
      %107 = sbr.rel (0) target = $region45
    $region44: #{tpu_custom_call.1} parent=1 // pred_region
      %108 = dma.done [#allocation3], 64
    $region45: #{tpu_custom_call.1} parent=1 // pred_fallthru
      _
    // Predicated region
    $region46: #{tpu_custom_call.1} parent=1 // pred_check
      _
    $region47: #{tpu_custom_call.1} parent=1 // pred_check_branch
      %110 = sbr.rel (0) target = $region49
    $region48: #{tpu_custom_call.1} parent=1 // pred_region
      %111 = dma.done [#allocation6], 8192
    $region49: #{tpu_custom_call.1} parent=1 // pred_fallthru
      _
    // Predicated region
    $region50: #{tpu_custom_call.1} parent=1 // pred_check
      _
    $region51: #{tpu_custom_call.1} parent=1 // pred_check_branch
      %113 = sbr.rel (0) target = $region53
    $region52: #{tpu_custom_call.1} parent=1 // pred_region
      %114 = dma.done [#allocation6], 128
    $region53: #{tpu_custom_call.1} parent=1 // pred_fallthru
      _
    // Predicated region
    $region54: #{tpu_custom_call.1} parent=1 // pred_check
      _
    $region55: #{tpu_custom_call.1} parent=1 // pred_check_branch
      %116 = sbr.rel (0) target = $region57
    $region56: #{tpu_custom_call.1} parent=1 // pred_region
      %117 = dma.done [#allocation9], 16384
    $region57: #{tpu_custom_call.1} parent=1 // pred_fallthru
      _
    // Predicated region
    $region58: #{tpu_custom_call.1} parent=1 // pred_check
      _
    $region59: #{tpu_custom_call.1} parent=1 // pred_check_branch
      %119 = sbr.rel (0) target = $region61
    $region60: #{tpu_custom_call.1} parent=1 // pred_region
      %120 = dma.done [#allocation9], 16384
    $region61: #{tpu_custom_call.1} parent=1 // pred_fallthru
      _
    // Predicated region
    $region62: #{tpu_custom_call.1} parent=1 // pred_check
      _
    $region63: #{tpu_custom_call.1} parent=1 // pred_check_branch
      %122 = sbr.rel (0) target = $region65
    $region64: #{tpu_custom_call.1} parent=1 // pred_region
      %123 = dma.done [#allocation12], 4096
    $region65: #{tpu_custom_call.1} parent=1 // pred_fallthru
      _
    // Predicated region
    $region66: #{tpu_custom_call.1} parent=1 // pred_check
      _
    $region67: #{tpu_custom_call.1} parent=1 // pred_check_branch
      %125 = sbr.rel (0) target = $region69
    $region68: #{tpu_custom_call.1} parent=1 // pred_region
      %126 = dma.done [#allocation12], 4096
    $region69: #{tpu_custom_call.1} parent=1 // pred_fallthru
      _
    %v128 = vld [vmem:[#allocation2] sm:$0xf]
    %v129 = vld [vmem:[#allocation5] sm:$0xff]
    %v130 = vld [vmem:[#allocation5 + $0x8] sm:$0xff]
    %v131 = vld [vmem:[#allocation5 + $0x10] sm:$0xff]
    %v132 = vld [vmem:[#allocation5 + $0x18] sm:$0xff]
    %v133 = vld [vmem:[#allocation5 + $0x20] sm:$0xff]
    %v134 = vld [vmem:[#allocation5 + $0x28] sm:$0xff]
    %v135 = vld [vmem:[#allocation5 + $0x30] sm:$0xff]
    %v136 = vld [vmem:[#allocation5 + $0x38] sm:$0xff]
    %v137 = vld [vmem:[#allocation5 + $0x40] sm:$0xff]
    %v138 = vld [vmem:[#allocation5 + $0x48] sm:$0xff]
    %v139 = vld [vmem:[#allocation5 + $0x50] sm:$0xff]
    %v140 = vld [vmem:[#allocation5 + $0x58] sm:$0xff]
    %v141 = vld [vmem:[#allocation5 + $0x60] sm:$0xff]
    %v142 = vld [vmem:[#allocation5 + $0x68] sm:$0xff]
    %v143 = vld [vmem:[#allocation5 + $0x70] sm:$0xff]
    %v144 = vld [vmem:[#allocation5 + $0x78] sm:$0xff]
    %v145 = vld [vmem:[#allocation5 + $0x80] sm:$0xff]
    %v146 = vld [vmem:[#allocation5 + $0x88] sm:$0xff]
    %v147 = vld [vmem:[#allocation5 + $0x90] sm:$0xff]
    %v148 = vld [vmem:[#allocation5 + $0x98] sm:$0xff]
    %v149 = vld [vmem:[#allocation5 + $0xa0] sm:$0xff]
    %v150 = vld [vmem:[#allocation5 + $0xa8] sm:$0xff]
    %v151 = vld [vmem:[#allocation5 + $0xb0] sm:$0xff]
    %v152 = vld [vmem:[#allocation5 + $0xb8] sm:$0xff]
    %v153 = vld [vmem:[#allocation5 + $0xc0] sm:$0xff]
    %v154 = vld [vmem:[#allocation5 + $0xc8] sm:$0xff]
    %v155 = vld [vmem:[#allocation5 + $0xd0] sm:$0xff]
    %v156 = vld [vmem:[#allocation5 + $0xd8] sm:$0xff]
    %v157 = vld [vmem:[#allocation5 + $0xe0] sm:$0xff]
    %v158 = vld [vmem:[#allocation5 + $0xe8] sm:$0xff]
    %v159 = vld [vmem:[#allocation5 + $0xf0] sm:$0xff]
    %v160 = vld [vmem:[#allocation5 + $0xf8] sm:$0xff]
    %v161 = vld [vmem:[#allocation5 + $0x100] sm:$0xff]
    %v162 = vld [vmem:[#allocation5 + $0x108] sm:$0xff]
    %v163 = vld [vmem:[#allocation5 + $0x110] sm:$0xff]
    %v164 = vld [vmem:[#allocation5 + $0x118] sm:$0xff]
    %v165 = vld [vmem:[#allocation5 + $0x120] sm:$0xff]
    %v166 = vld [vmem:[#allocation5 + $0x128] sm:$0xff]
    %v167 = vld [vmem:[#allocation5 + $0x130] sm:$0xff]
    %v168 = vld [vmem:[#allocation5 + $0x138] sm:$0xff]
    %v169 = vld [vmem:[#allocation5 + $0x140] sm:$0xff]
    %v170 = vld [vmem:[#allocation5 + $0x148] sm:$0xff]
    %v171 = vld [vmem:[#allocation5 + $0x150] sm:$0xff]
    %v172 = vld [vmem:[#allocation5 + $0x158] sm:$0xff]
    %v173 = vld [vmem:[#allocation5 + $0x160] sm:$0xff]
    %v174 = vld [vmem:[#allocation5 + $0x168] sm:$0xff]
    %v175 = vld [vmem:[#allocation5 + $0x170] sm:$0xff]
    %v176 = vld [vmem:[#allocation5 + $0x178] sm:$0xff]
    %v177 = vld [vmem:[#allocation5 + $0x180] sm:$0xff]
    %v178 = vld [vmem:[#allocation5 + $0x188] sm:$0xff]
    %v179 = vld [vmem:[#allocation5 + $0x190] sm:$0xff]
    %v180 = vld [vmem:[#allocation5 + $0x198] sm:$0xff]
    %v181 = vld [vmem:[#allocation5 + $0x1a0] sm:$0xff]
    %v182 = vld [vmem:[#allocation5 + $0x1a8] sm:$0xff]
    %v183 = vld [vmem:[#allocation5 + $0x1b0] sm:$0xff]
    %v184 = vld [vmem:[#allocation5 + $0x1b8] sm:$0xff]
    %v185 = vld [vmem:[#allocation5 + $0x1c0] sm:$0xff]
    %v186 = vld [vmem:[#allocation5 + $0x1c8] sm:$0xff]
    %v187 = vld [vmem:[#allocation5 + $0x1d0] sm:$0xff]
    %v188 = vld [vmem:[#allocation5 + $0x1d8] sm:$0xff]
    %v189 = vld [vmem:[#allocation5 + $0x1e0] sm:$0xff]
    %v190 = vld [vmem:[#allocation5 + $0x1e8] sm:$0xff]
    %v191 = vld [vmem:[#allocation5 + $0x1f0] sm:$0xff]
    %v192 = vld [vmem:[#allocation5 + $0x1f8] sm:$0xff]
    %v193 = vld [vmem:[#allocation7] sm:$0xff]
    %v195 = vlaneseq
    %v196 = vshrl.u32 %v195, 7
    %v197 = vsub.s32 0, %v196
    %v198 = vrot.slane %v193, %v197
    %v199 = vlaneseq
    %v200 = vshrl.u32 %v199, 7
    %v201 = vsub.s32 1, %v200
    %v202 = vrot.slane %v193, %v201
    %v203 = vlaneseq
    %v204 = vshrl.u32 %v203, 7
    %v205 = vsub.s32 2, %v204
    %v206 = vrot.slane %v193, %v205
    %v207 = vlaneseq
    %v208 = vshrl.u32 %v207, 7
    %v209 = vsub.s32 3, %v208
    %v210 = vrot.slane %v193, %v209
    %v211 = vlaneseq
    %v212 = vshrl.u32 %v211, 7
    %v213 = vsub.s32 4, %v212
    %v214 = vrot.slane %v193, %v213
    %v215 = vlaneseq
    %v216 = vshrl.u32 %v215, 7
    %v217 = vsub.s32 5, %v216
    %v218 = vrot.slane %v193, %v217
    %v219 = vlaneseq
    %v220 = vshrl.u32 %v219, 7
    %v221 = vsub.s32 6, %v220
    %v222 = vrot.slane %v193, %v221
    %v223 = vlaneseq
    %v224 = vshrl.u32 %v223, 7
    %v225 = vsub.s32 7, %v224
    %v226 = vrot.slane %v193, %v225
    %v299 = vunpack.c.l.b16 %v129
    %v300 = vunpack.c.h.b16 %v129
    %v301 = vunpack.c.l.b16 %v130
    %v302 = vunpack.c.h.b16 %v130
    %v303 = vunpack.c.l.b16 %v131
    %v304 = vunpack.c.h.b16 %v131
    %v305 = vunpack.c.l.b16 %v132
    %v306 = vunpack.c.h.b16 %v132
    %v307 = vunpack.c.l.b16 %v133
    %v308 = vunpack.c.h.b16 %v133
    %v309 = vunpack.c.l.b16 %v134
    %v310 = vunpack.c.h.b16 %v134
    %v311 = vunpack.c.l.b16 %v135
    %v312 = vunpack.c.h.b16 %v135
    %v313 = vunpack.c.l.b16 %v136
    %v314 = vunpack.c.h.b16 %v136
    %v315 = vunpack.c.l.b16 %v137
    %v316 = vunpack.c.h.b16 %v137
    %v317 = vunpack.c.l.b16 %v138
    %v318 = vunpack.c.h.b16 %v138
    %v319 = vunpack.c.l.b16 %v139
    %v320 = vunpack.c.h.b16 %v139
    %v321 = vunpack.c.l.b16 %v140
    %v322 = vunpack.c.h.b16 %v140
    %v323 = vunpack.c.l.b16 %v141
    %v324 = vunpack.c.h.b16 %v141
    %v325 = vunpack.c.l.b16 %v142
    %v326 = vunpack.c.h.b16 %v142
    %v327 = vunpack.c.l.b16 %v143
    %v328 = vunpack.c.h.b16 %v143
    %v329 = vunpack.c.l.b16 %v144
    %v330 = vunpack.c.h.b16 %v144
    %v331 = vunpack.c.l.b16 %v145
    %v332 = vunpack.c.h.b16 %v145
    %v333 = vunpack.c.l.b16 %v146
    %v334 = vunpack.c.h.b16 %v146
    %v335 = vunpack.c.l.b16 %v147
    %v336 = vunpack.c.h.b16 %v147
    %v337 = vunpack.c.l.b16 %v148
    %v338 = vunpack.c.h.b16 %v148
    %v339 = vunpack.c.l.b16 %v149
    %v340 = vunpack.c.h.b16 %v149
    %v341 = vunpack.c.l.b16 %v150
    %v342 = vunpack.c.h.b16 %v150
    %v343 = vunpack.c.l.b16 %v151
    %v344 = vunpack.c.h.b16 %v151
    %v345 = vunpack.c.l.b16 %v152
    %v346 = vunpack.c.h.b16 %v152
    %v347 = vunpack.c.l.b16 %v153
    %v348 = vunpack.c.h.b16 %v153
    %v349 = vunpack.c.l.b16 %v154
    %v350 = vunpack.c.h.b16 %v154
    %v351 = vunpack.c.l.b16 %v155
    %v352 = vunpack.c.h.b16 %v155
    %v353 = vunpack.c.l.b16 %v156
    %v354 = vunpack.c.h.b16 %v156
    %v355 = vunpack.c.l.b16 %v157
    %v356 = vunpack.c.h.b16 %v157
    %v357 = vunpack.c.l.b16 %v158
    %v358 = vunpack.c.h.b16 %v158
    %v359 = vunpack.c.l.b16 %v159
    %v360 = vunpack.c.h.b16 %v159
    %v361 = vunpack.c.l.b16 %v160
    %v362 = vunpack.c.h.b16 %v160
    %v363 = vunpack.c.l.b16 %v161
    %v364 = vunpack.c.h.b16 %v161
    %v365 = vunpack.c.l.b16 %v162
    %v366 = vunpack.c.h.b16 %v162
    %v367 = vunpack.c.l.b16 %v163
    %v368 = vunpack.c.h.b16 %v163
    %v369 = vunpack.c.l.b16 %v164
    %v370 = vunpack.c.h.b16 %v164
    %v371 = vunpack.c.l.b16 %v165
    %v372 = vunpack.c.h.b16 %v165
    %v373 = vunpack.c.l.b16 %v166
    %v374 = vunpack.c.h.b16 %v166
    %v375 = vunpack.c.l.b16 %v167
    %v376 = vunpack.c.h.b16 %v167
    %v377 = vunpack.c.l.b16 %v168
    %v378 = vunpack.c.h.b16 %v168
    %v379 = vunpack.c.l.b16 %v169
    %v380 = vunpack.c.h.b16 %v169
    %v381 = vunpack.c.l.b16 %v170
    %v382 = vunpack.c.h.b16 %v170
    %v383 = vunpack.c.l.b16 %v171
    %v384 = vunpack.c.h.b16 %v171
    %v385 = vunpack.c.l.b16 %v172
    %v386 = vunpack.c.h.b16 %v172
    %v387 = vunpack.c.l.b16 %v173
    %v388 = vunpack.c.h.b16 %v173
    %v389 = vunpack.c.l.b16 %v174
    %v390 = vunpack.c.h.b16 %v174
    %v391 = vunpack.c.l.b16 %v175
    %v392 = vunpack.c.h.b16 %v175
    %v393 = vunpack.c.l.b16 %v176
    %v394 = vunpack.c.h.b16 %v176
    %v395 = vunpack.c.l.b16 %v177
    %v396 = vunpack.c.h.b16 %v177
    %v397 = vunpack.c.l.b16 %v178
    %v398 = vunpack.c.h.b16 %v178
    %v399 = vunpack.c.l.b16 %v179
    %v400 = vunpack.c.h.b16 %v179
    %v401 = vunpack.c.l.b16 %v180
    %v402 = vunpack.c.h.b16 %v180
    %v403 = vunpack.c.l.b16 %v181
    %v404 = vunpack.c.h.b16 %v181
    %v405 = vunpack.c.l.b16 %v182
    %v406 = vunpack.c.h.b16 %v182
    %v407 = vunpack.c.l.b16 %v183
    %v408 = vunpack.c.h.b16 %v183
    %v409 = vunpack.c.l.b16 %v184
    %v410 = vunpack.c.h.b16 %v184
    %v411 = vunpack.c.l.b16 %v185
    %v412 = vunpack.c.h.b16 %v185
    %v413 = vunpack.c.l.b16 %v186
    %v414 = vunpack.c.h.b16 %v186
    %v415 = vunpack.c.l.b16 %v187
    %v416 = vunpack.c.h.b16 %v187
    %v417 = vunpack.c.l.b16 %v188
    %v418 = vunpack.c.h.b16 %v188
    %v419 = vunpack.c.l.b16 %v189
    %v420 = vunpack.c.h.b16 %v189
    %v421 = vunpack.c.l.b16 %v190
    %v422 = vunpack.c.h.b16 %v190
    %v423 = vunpack.c.l.b16 %v191
    %v424 = vunpack.c.h.b16 %v191
    %v425 = vunpack.c.l.b16 %v192
    %v426 = vunpack.c.h.b16 %v192
    %v427 = vpack.c.b16 %v307, %v299
    %v428 = vpack.c.b16 %v308, %v300
    %v429 = vpack.c.b16 %v309, %v301
    %v430 = vpack.c.b16 %v310, %v302
    %v431 = vpack.c.b16 %v311, %v303
    %v432 = vpack.c.b16 %v312, %v304
    %v433 = vpack.c.b16 %v313, %v305
    %v434 = vpack.c.b16 %v314, %v306
    %v435 = vpack.c.b16 %v323, %v315
    %v436 = vpack.c.b16 %v324, %v316
    %v437 = vpack.c.b16 %v325, %v317
    %v438 = vpack.c.b16 %v326, %v318
    %v439 = vpack.c.b16 %v327, %v319
    %v440 = vpack.c.b16 %v328, %v320
    %v441 = vpack.c.b16 %v329, %v321
    %v442 = vpack.c.b16 %v330, %v322
    %v443 = vpack.c.b16 %v339, %v331
    %v444 = vpack.c.b16 %v340, %v332
    %v445 = vpack.c.b16 %v341, %v333
    %v446 = vpack.c.b16 %v342, %v334
    %v447 = vpack.c.b16 %v343, %v335
    %v448 = vpack.c.b16 %v344, %v336
    %v449 = vpack.c.b16 %v345, %v337
    %v450 = vpack.c.b16 %v346, %v338
    %v451 = vpack.c.b16 %v355, %v347
    %v452 = vpack.c.b16 %v356, %v348
    %v453 = vpack.c.b16 %v357, %v349
    %v454 = vpack.c.b16 %v358, %v350
    %v455 = vpack.c.b16 %v359, %v351
    %v456 = vpack.c.b16 %v360, %v352
    %v457 = vpack.c.b16 %v361, %v353
    %v458 = vpack.c.b16 %v362, %v354
    %v459 = vpack.c.b16 %v371, %v363
    %v460 = vpack.c.b16 %v372, %v364
    %v461 = vpack.c.b16 %v373, %v365
    %v462 = vpack.c.b16 %v374, %v366
    %v463 = vpack.c.b16 %v375, %v367
    %v464 = vpack.c.b16 %v376, %v368
    %v465 = vpack.c.b16 %v377, %v369
    %v466 = vpack.c.b16 %v378, %v370
    %v467 = vpack.c.b16 %v387, %v379
    %v468 = vpack.c.b16 %v388, %v380
    %v469 = vpack.c.b16 %v389, %v381
    %v470 = vpack.c.b16 %v390, %v382
    %v471 = vpack.c.b16 %v391, %v383
    %v472 = vpack.c.b16 %v392, %v384
    %v473 = vpack.c.b16 %v393, %v385
    %v474 = vpack.c.b16 %v394, %v386
    %v475 = vpack.c.b16 %v403, %v395
    %v476 = vpack.c.b16 %v404, %v396
    %v477 = vpack.c.b16 %v405, %v397
    %v478 = vpack.c.b16 %v406, %v398
    %v479 = vpack.c.b16 %v407, %v399
    %v480 = vpack.c.b16 %v408, %v400
    %v481 = vpack.c.b16 %v409, %v401
    %v482 = vpack.c.b16 %v410, %v402
    %v483 = vpack.c.b16 %v419, %v411
    %v484 = vpack.c.b16 %v420, %v412
    %v485 = vpack.c.b16 %v421, %v413
    %v486 = vpack.c.b16 %v422, %v414
    %v487 = vpack.c.b16 %v423, %v415
    %v488 = vpack.c.b16 %v424, %v416
    %v489 = vpack.c.b16 %v425, %v417
    %v490 = vpack.c.b16 %v426, %v418
    %555 = vmatprep.subr.bf16.mxu0 %v484
    %556 = vmatpush1.bf16.msra.mxu0 %v483
    %557 = vmatprep.subr.bf16.mxu0 %v476
    %558 = vmatpush1.bf16.msra.mxu0 %v475
    %559 = vmatprep.subr.bf16.mxu0 %v468
    %560 = vmatpush1.bf16.msra.mxu0 %v467
    %561 = vmatprep.subr.bf16.mxu0 %v460
    %562 = vmatpush1.bf16.msra.mxu0 %v459
    %563 = vmatprep.subr.bf16.mxu0 %v452
    %564 = vmatpush1.bf16.msra.mxu0 %v451
    %565 = vmatprep.subr.bf16.mxu0 %v444
    %566 = vmatpush1.bf16.msra.mxu0 %v443
    %567 = vmatprep.subr.bf16.mxu0 %v436
    %568 = vmatpush1.bf16.msra.mxu0 %v435
    %569 = vmatprep.subr.bf16.mxu0 %v428
    %570 = vmatpush1.bf16.msra.mxu0 %v427
    %571 = vmatprep.subr.bf16.mxu0 0
    %572 = vmatpush2.bf16.msra.mxu0 0
    %573 = vmatprep.subr.bf16.mxu0 0
    %574 = vmatpush2.bf16.msra.mxu0 0
    %575 = vmatprep.subr.bf16.mxu0 0
    %576 = vmatpush2.bf16.msra.mxu0 0
    %577 = vmatprep.subr.bf16.mxu0 0
    %578 = vmatpush2.bf16.msra.mxu0 0
    %579 = vmatprep.subr.bf16.mxu0 0
    %580 = vmatpush2.bf16.msra.mxu0 0
    %581 = vmatprep.subr.bf16.mxu0 0
    %582 = vmatpush2.bf16.msra.mxu0 0
    %583 = vmatprep.subr.bf16.mxu0 0
    %584 = vmatpush2.bf16.msra.mxu0 0
    %585 = vmatprep.subr.bf16.mxu0 0
    %586 = vmatpush2.bf16.msra.mxu0 0
    %587 = vmatprep.mubr.bf16.mxu0 0
    %588 = vmatmul.mubr.bf16.gmra.mxu0 %v128
    %v589 = vpop.f32.mrf.mxu0
    %v590 = vadd.f32 %v198, %v589
    %v591 = vpop.f32.mrf.mxu0
    %v592 = vadd.f32 %v202, %v591
    %v593 = vpop.f32.mrf.mxu0
    %v594 = vpop.f32.mrf.mxu0
    %595 = vdwg.mxu0
    %596 = vmatprep.subr.bf16.mxu0 %v486
    %597 = vmatpush1.bf16.msra.mxu0 %v485
    %598 = vmatprep.subr.bf16.mxu0 %v478
    %599 = vmatpush1.bf16.msra.mxu0 %v477
    %600 = vmatprep.subr.bf16.mxu0 %v470
    %601 = vmatpush1.bf16.msra.mxu0 %v469
    %602 = vmatprep.subr.bf16.mxu0 %v462
    %603 = vmatpush1.bf16.msra.mxu0 %v461
    %604 = vmatprep.subr.bf16.mxu0 %v454
    %605 = vmatpush1.bf16.msra.mxu0 %v453
    %606 = vmatprep.subr.bf16.mxu0 %v446
    %607 = vmatpush1.bf16.msra.mxu0 %v445
    %608 = vmatprep.subr.bf16.mxu0 %v438
    %609 = vmatpush1.bf16.msra.mxu0 %v437
    %610 = vmatprep.subr.bf16.mxu0 %v430
    %611 = vmatpush1.bf16.msra.mxu0 %v429
    %612 = vmatprep.subr.bf16.mxu0 0
    %613 = vmatpush2.bf16.msra.mxu0 0
    %614 = vmatprep.subr.bf16.mxu0 0
    %615 = vmatpush2.bf16.msra.mxu0 0
    %616 = vmatprep.subr.bf16.mxu0 0
    %617 = vmatpush2.bf16.msra.mxu0 0
    %618 = vmatprep.subr.bf16.mxu0 0
    %619 = vmatpush2.bf16.msra.mxu0 0
    %620 = vmatprep.subr.bf16.mxu0 0
    %621 = vmatpush2.bf16.msra.mxu0 0
    %622 = vmatprep.subr.bf16.mxu0 0
    %623 = vmatpush2.bf16.msra.mxu0 0
    %624 = vmatprep.subr.bf16.mxu0 0
    %625 = vmatpush2.bf16.msra.mxu0 0
    %626 = vmatprep.subr.bf16.mxu0 0
    %627 = vmatpush2.bf16.msra.mxu0 0
    %628 = vmatprep.mubr.bf16.mxu0 0
    %629 = vmatmul.mubr.bf16.gmra.mxu0 %v128
    %v630 = vpop.f32.mrf.mxu0
    %v631 = vadd.f32 %v206, %v630
    %v632 = vpop.f32.mrf.mxu0
    %v633 = vadd.f32 %v210, %v632
    %v634 = vpop.f32.mrf.mxu0
    %v635 = vpop.f32.mrf.mxu0
    %636 = vdwg.mxu0
    %637 = vmatprep.subr.bf16.mxu0 %v488
    %638 = vmatpush1.bf16.msra.mxu0 %v487
    %639 = vmatprep.subr.bf16.mxu0 %v480
    %640 = vmatpush1.bf16.msra.mxu0 %v479
    %641 = vmatprep.subr.bf16.mxu0 %v472
    %642 = vmatpush1.bf16.msra.mxu0 %v471
    %643 = vmatprep.subr.bf16.mxu0 %v464
    %644 = vmatpush1.bf16.msra.mxu0 %v463
    %645 = vmatprep.subr.bf16.mxu0 %v456
    %646 = vmatpush1.bf16.msra.mxu0 %v455
    %647 = vmatprep.subr.bf16.mxu0 %v448
    %648 = vmatpush1.bf16.msra.mxu0 %v447
    %649 = vmatprep.subr.bf16.mxu0 %v440
    %650 = vmatpush1.bf16.msra.mxu0 %v439
    %651 = vmatprep.subr.bf16.mxu0 %v432
    %652 = vmatpush1.bf16.msra.mxu0 %v431
    %653 = vmatprep.subr.bf16.mxu0 0
    %654 = vmatpush2.bf16.msra.mxu0 0
    %655 = vmatprep.subr.bf16.mxu0 0
    %656 = vmatpush2.bf16.msra.mxu0 0
    %657 = vmatprep.subr.bf16.mxu0 0
    %658 = vmatpush2.bf16.msra.mxu0 0
    %659 = vmatprep.subr.bf16.mxu0 0
    %660 = vmatpush2.bf16.msra.mxu0 0
    %661 = vmatprep.subr.bf16.mxu0 0
    %662 = vmatpush2.bf16.msra.mxu0 0
    %663 = vmatprep.subr.bf16.mxu0 0
    %664 = vmatpush2.bf16.msra.mxu0 0
    %665 = vmatprep.subr.bf16.mxu0 0
    %666 = vmatpush2.bf16.msra.mxu0 0
    %667 = vmatprep.subr.bf16.mxu0 0
    %668 = vmatpush2.bf16.msra.mxu0 0
    %669 = vmatprep.mubr.bf16.mxu0 0
    %670 = vmatmul.mubr.bf16.gmra.mxu0 %v128
    %v671 = vpop.f32.mrf.mxu0
    %v672 = vadd.f32 %v214, %v671
    %v673 = vpop.f32.mrf.mxu0
    %v674 = vadd.f32 %v218, %v673
    %v675 = vpop.f32.mrf.mxu0
    %v676 = vpop.f32.mrf.mxu0
    %677 = vdwg.mxu0
    %678 = vmatprep.subr.bf16.mxu0 %v490
    %679 = vmatpush1.bf16.msra.mxu0 %v489
    %680 = vmatprep.subr.bf16.mxu0 %v482
    %681 = vmatpush1.bf16.msra.mxu0 %v481
    %682 = vmatprep.subr.bf16.mxu0 %v474
    %683 = vmatpush1.bf16.msra.mxu0 %v473
    %684 = vmatprep.subr.bf16.mxu0 %v466
    %685 = vmatpush1.bf16.msra.mxu0 %v465
    %686 = vmatprep.subr.bf16.mxu0 %v458
    %687 = vmatpush1.bf16.msra.mxu0 %v457
    %688 = vmatprep.subr.bf16.mxu0 %v450
    %689 = vmatpush1.bf16.msra.mxu0 %v449
    %690 = vmatprep.subr.bf16.mxu0 %v442
    %691 = vmatpush1.bf16.msra.mxu0 %v441
    %692 = vmatprep.subr.bf16.mxu0 %v434
    %693 = vmatpush1.bf16.msra.mxu0 %v433
    %694 = vmatprep.subr.bf16.mxu0 0
    %695 = vmatpush2.bf16.msra.mxu0 0
    %696 = vmatprep.subr.bf16.mxu0 0
    %697 = vmatpush2.bf16.msra.mxu0 0
    %698 = vmatprep.subr.bf16.mxu0 0
    %699 = vmatpush2.bf16.msra.mxu0 0
    %700 = vmatprep.subr.bf16.mxu0 0
    %701 = vmatpush2.bf16.msra.mxu0 0
    %702 = vmatprep.subr.bf16.mxu0 0
    %703 = vmatpush2.bf16.msra.mxu0 0
    %704 = vmatprep.subr.bf16.mxu0 0
    %705 = vmatpush2.bf16.msra.mxu0 0
    %706 = vmatprep.subr.bf16.mxu0 0
    %707 = vmatpush2.bf16.msra.mxu0 0
    %708 = vmatprep.subr.bf16.mxu0 0
    %709 = vmatpush2.bf16.msra.mxu0 0
    %710 = vmatprep.mubr.bf16.mxu0 0
    %711 = vmatmul.mubr.bf16.gmra.mxu0 %v128
    %v712 = vpop.f32.mrf.mxu0
    %v713 = vadd.f32 %v222, %v712
    %v714 = vpop.f32.mrf.mxu0
    %v715 = vadd.f32 %v226, %v714
    %v716 = vpop.f32.mrf.mxu0
    %v717 = vpop.f32.mrf.mxu0
    %718 = vdwg.mxu0
    %v719 = vmax.f32 %v590, 0.0
    %v720 = vmax.f32 %v592, 0.0
    %v721 = vmax.f32 %v631, 0.0
    %v722 = vmax.f32 %v633, 0.0
    %v723 = vmax.f32 %v672, 0.0
    %v724 = vmax.f32 %v674, 0.0
    %v725 = vmax.f32 %v713, 0.0
    %v726 = vmax.f32 %v715, 0.0
    %v727 = vpack.c.bf16 %v719, %v719
    %v728 = vpack.c.bf16 %v720, %v720
    %v729 = vpack.c.bf16 %v721, %v721
    %v730 = vpack.c.bf16 %v722, %v722
    %v731 = vpack.c.bf16 %v723, %v723
    %v732 = vpack.c.bf16 %v724, %v724
    %v733 = vpack.c.bf16 %v725, %v725
    %v734 = vpack.c.bf16 %v726, %v726
    %v735 = vld [vmem:[#allocation8] sm:$0xff]
    %v736 = vld [vmem:[#allocation8 + $0x8] sm:$0xff]
    %v737 = vld [vmem:[#allocation8 + $0x10] sm:$0xff]
    %v738 = vld [vmem:[#allocation8 + $0x18] sm:$0xff]
    %v739 = vld [vmem:[#allocation8 + $0x20] sm:$0xff]
    %v740 = vld [vmem:[#allocation8 + $0x28] sm:$0xff]
    %v741 = vld [vmem:[#allocation8 + $0x30] sm:$0xff]
    %v742 = vld [vmem:[#allocation8 + $0x38] sm:$0xff]
    %v743 = vld [vmem:[#allocation8 + $0x40] sm:$0xff]
    %v744 = vld [vmem:[#allocation8 + $0x48] sm:$0xff]
    %v745 = vld [vmem:[#allocation8 + $0x50] sm:$0xff]
    %v746 = vld [vmem:[#allocation8 + $0x58] sm:$0xff]
    %v747 = vld [vmem:[#allocation8 + $0x60] sm:$0xff]
    %v748 = vld [vmem:[#allocation8 + $0x68] sm:$0xff]
    %v749 = vld [vmem:[#allocation8 + $0x70] sm:$0xff]
    %v750 = vld [vmem:[#allocation8 + $0x78] sm:$0xff]
    %v751 = vld [vmem:[#allocation8 + $0x80] sm:$0xff]
    %v752 = vld [vmem:[#allocation8 + $0x88] sm:$0xff]
    %v753 = vld [vmem:[#allocation8 + $0x90] sm:$0xff]
    %v754 = vld [vmem:[#allocation8 + $0x98] sm:$0xff]
    %v755 = vld [vmem:[#allocation8 + $0xa0] sm:$0xff]
    %v756 = vld [vmem:[#allocation8 + $0xa8] sm:$0xff]
    %v757 = vld [vmem:[#allocation8 + $0xb0] sm:$0xff]
    %v758 = vld [vmem:[#allocation8 + $0xb8] sm:$0xff]
    %v759 = vld [vmem:[#allocation8 + $0xc0] sm:$0xff]
    %v760 = vld [vmem:[#allocation8 + $0xc8] sm:$0xff]
    %v761 = vld [vmem:[#allocation8 + $0xd0] sm:$0xff]
    %v762 = vld [vmem:[#allocation8 + $0xd8] sm:$0xff]
    %v763 = vld [vmem:[#allocation8 + $0xe0] sm:$0xff]
    %v764 = vld [vmem:[#allocation8 + $0xe8] sm:$0xff]
    %v765 = vld [vmem:[#allocation8 + $0xf0] sm:$0xff]
    %v766 = vld [vmem:[#allocation8 + $0xf8] sm:$0xff]
    %v767 = vld [vmem:[#allocation8 + $0x100] sm:$0xff]
    %v768 = vld [vmem:[#allocation8 + $0x108] sm:$0xff]
    %v769 = vld [vmem:[#allocation8 + $0x110] sm:$0xff]
    %v770 = vld [vmem:[#allocation8 + $0x118] sm:$0xff]
    %v771 = vld [vmem:[#allocation8 + $0x120] sm:$0xff]
    %v772 = vld [vmem:[#allocation8 + $0x128] sm:$0xff]
    %v773 = vld [vmem:[#allocation8 + $0x130] sm:$0xff]
    %v774 = vld [vmem:[#allocation8 + $0x138] sm:$0xff]
    %v775 = vld [vmem:[#allocation8 + $0x140] sm:$0xff]
    %v776 = vld [vmem:[#allocation8 + $0x148] sm:$0xff]
    %v777 = vld [vmem:[#allocation8 + $0x150] sm:$0xff]
    %v778 = vld [vmem:[#allocation8 + $0x158] sm:$0xff]
    %v779 = vld [vmem:[#allocation8 + $0x160] sm:$0xff]
    %v780 = vld [vmem:[#allocation8 + $0x168] sm:$0xff]
    %v781 = vld [vmem:[#allocation8 + $0x170] sm:$0xff]
    %v782 = vld [vmem:[#allocation8 + $0x178] sm:$0xff]
    %v783 = vld [vmem:[#allocation8 + $0x180] sm:$0xff]
    %v784 = vld [vmem:[#allocation8 + $0x188] sm:$0xff]
    %v785 = vld [vmem:[#allocation8 + $0x190] sm:$0xff]
    %v786 = vld [vmem:[#allocation8 + $0x198] sm:$0xff]
    %v787 = vld [vmem:[#allocation8 + $0x1a0] sm:$0xff]
    %v788 = vld [vmem:[#allocation8 + $0x1a8] sm:$0xff]
    %v789 = vld [vmem:[#allocation8 + $0x1b0] sm:$0xff]
    %v790 = vld [vmem:[#allocation8 + $0x1b8] sm:$0xff]
    %v791 = vld [vmem:[#allocation8 + $0x1c0] sm:$0xff]
    %v792 = vld [vmem:[#allocation8 + $0x1c8] sm:$0xff]
    %v793 = vld [vmem:[#allocation8 + $0x1d0] sm:$0xff]
    %v794 = vld [vmem:[#allocation8 + $0x1d8] sm:$0xff]
    %v795 = vld [vmem:[#allocation8 + $0x1e0] sm:$0xff]
    %v796 = vld [vmem:[#allocation8 + $0x1e8] sm:$0xff]
    %v797 = vld [vmem:[#allocation8 + $0x1f0] sm:$0xff]
    %v798 = vld [vmem:[#allocation8 + $0x1f8] sm:$0xff]
    %v799 = vld [vmem:[#allocation8 + $0x200] sm:$0xff]
    %v800 = vld [vmem:[#allocation8 + $0x208] sm:$0xff]
    %v801 = vld [vmem:[#allocation8 + $0x210] sm:$0xff]
    %v802 = vld [vmem:[#allocation8 + $0x218] sm:$0xff]
    %v803 = vld [vmem:[#allocation8 + $0x220] sm:$0xff]
    %v804 = vld [vmem:[#allocation8 + $0x228] sm:$0xff]
    %v805 = vld [vmem:[#allocation8 + $0x230] sm:$0xff]
    %v806 = vld [vmem:[#allocation8 + $0x238] sm:$0xff]
    %v807 = vld [vmem:[#allocation8 + $0x240] sm:$0xff]
    %v808 = vld [vmem:[#allocation8 + $0x248] sm:$0xff]
    %v809 = vld [vmem:[#allocation8 + $0x250] sm:$0xff]
    %v810 = vld [vmem:[#allocation8 + $0x258] sm:$0xff]
    %v811 = vld [vmem:[#allocation8 + $0x260] sm:$0xff]
    %v812 = vld [vmem:[#allocation8 + $0x268] sm:$0xff]
    %v813 = vld [vmem:[#allocation8 + $0x270] sm:$0xff]
    %v814 = vld [vmem:[#allocation8 + $0x278] sm:$0xff]
    %v815 = vld [vmem:[#allocation8 + $0x280] sm:$0xff]
    %v816 = vld [vmem:[#allocation8 + $0x288] sm:$0xff]
    %v817 = vld [vmem:[#allocation8 + $0x290] sm:$0xff]
    %v818 = vld [vmem:[#allocation8 + $0x298] sm:$0xff]
    %v819 = vld [vmem:[#allocation8 + $0x2a0] sm:$0xff]
    %v820 = vld [vmem:[#allocation8 + $0x2a8] sm:$0xff]
    %v821 = vld [vmem:[#allocation8 + $0x2b0] sm:$0xff]
    %v822 = vld [vmem:[#allocation8 + $0x2b8] sm:$0xff]
    %v823 = vld [vmem:[#allocation8 + $0x2c0] sm:$0xff]
    %v824 = vld [vmem:[#allocation8 + $0x2c8] sm:$0xff]
    %v825 = vld [vmem:[#allocation8 + $0x2d0] sm:$0xff]
    %v826 = vld [vmem:[#allocation8 + $0x2d8] sm:$0xff]
    %v827 = vld [vmem:[#allocation8 + $0x2e0] sm:$0xff]
    %v828 = vld [vmem:[#allocation8 + $0x2e8] sm:$0xff]
    %v829 = vld [vmem:[#allocation8 + $0x2f0] sm:$0xff]
    %v830 = vld [vmem:[#allocation8 + $0x2f8] sm:$0xff]
    %v831 = vld [vmem:[#allocation8 + $0x300] sm:$0xff]
    %v832 = vld [vmem:[#allocation8 + $0x308] sm:$0xff]
    %v833 = vld [vmem:[#allocation8 + $0x310] sm:$0xff]
    %v834 = vld [vmem:[#allocation8 + $0x318] sm:$0xff]
    %v835 = vld [vmem:[#allocation8 + $0x320] sm:$0xff]
    %v836 = vld [vmem:[#allocation8 + $0x328] sm:$0xff]
    %v837 = vld [vmem:[#allocation8 + $0x330] sm:$0xff]
    %v838 = vld [vmem:[#allocation8 + $0x338] sm:$0xff]
    %v839 = vld [vmem:[#allocation8 + $0x340] sm:$0xff]
    %v840 = vld [vmem:[#allocation8 + $0x348] sm:$0xff]
    %v841 = vld [vmem:[#allocation8 + $0x350] sm:$0xff]
    %v842 = vld [vmem:[#allocation8 + $0x358] sm:$0xff]
    %v843 = vld [vmem:[#allocation8 + $0x360] sm:$0xff]
    %v844 = vld [vmem:[#allocation8 + $0x368] sm:$0xff]
    %v845 = vld [vmem:[#allocation8 + $0x370] sm:$0xff]
    %v846 = vld [vmem:[#allocation8 + $0x378] sm:$0xff]
    %v847 = vld [vmem:[#allocation8 + $0x380] sm:$0xff]
    %v848 = vld [vmem:[#allocation8 + $0x388] sm:$0xff]
    %v849 = vld [vmem:[#allocation8 + $0x390] sm:$0xff]
    %v850 = vld [vmem:[#allocation8 + $0x398] sm:$0xff]
    %v851 = vld [vmem:[#allocation8 + $0x3a0] sm:$0xff]
    %v852 = vld [vmem:[#allocation8 + $0x3a8] sm:$0xff]
    %v853 = vld [vmem:[#allocation8 + $0x3b0] sm:$0xff]
    %v854 = vld [vmem:[#allocation8 + $0x3b8] sm:$0xff]
    %v855 = vld [vmem:[#allocation8 + $0x3c0] sm:$0xff]
    %v856 = vld [vmem:[#allocation8 + $0x3c8] sm:$0xff]
    %v857 = vld [vmem:[#allocation8 + $0x3d0] sm:$0xff]
    %v858 = vld [vmem:[#allocation8 + $0x3d8] sm:$0xff]
    %v859 = vld [vmem:[#allocation8 + $0x3e0] sm:$0xff]
    %v860 = vld [vmem:[#allocation8 + $0x3e8] sm:$0xff]
    %v861 = vld [vmem:[#allocation8 + $0x3f0] sm:$0xff]
    %v862 = vld [vmem:[#allocation8 + $0x3f8] sm:$0xff]
    %v863 = vld [vmem:[%s4] sm:$0xf]
    %v865 = vlaneseq
    %v866 = vshrl.u32 %v865, 7
    %v867 = vsub.s32 0, %v866
    %v868 = vrot.slane %v863, %v867
    %v869 = vlaneseq
    %v870 = vshrl.u32 %v869, 7
    %v871 = vsub.s32 1, %v870
    %v872 = vrot.slane %v863, %v871
    %v873 = vlaneseq
    %v874 = vshrl.u32 %v873, 7
    %v875 = vsub.s32 2, %v874
    %v876 = vrot.slane %v863, %v875
    %v877 = vlaneseq
    %v878 = vshrl.u32 %v877, 7
    %v879 = vsub.s32 3, %v878
    %v880 = vrot.slane %v863, %v879
    %v1013 = vunpack.c.l.b16 %v735
    %v1014 = vunpack.c.h.b16 %v735
    %v1015 = vunpack.c.l.b16 %v736
    %v1016 = vunpack.c.h.b16 %v736
    %v1017 = vunpack.c.l.b16 %v737
    %v1018 = vunpack.c.h.b16 %v737
    %v1019 = vunpack.c.l.b16 %v738
    %v1020 = vunpack.c.h.b16 %v738
    %v1021 = vunpack.c.l.b16 %v739
    %v1022 = vunpack.c.h.b16 %v739
    %v1023 = vunpack.c.l.b16 %v740
    %v1024 = vunpack.c.h.b16 %v740
    %v1025 = vunpack.c.l.b16 %v741
    %v1026 = vunpack.c.h.b16 %v741
    %v1027 = vunpack.c.l.b16 %v742
    %v1028 = vunpack.c.h.b16 %v742
    %v1029 = vunpack.c.l.b16 %v743
    %v1030 = vunpack.c.h.b16 %v743
    %v1031 = vunpack.c.l.b16 %v744
    %v1032 = vunpack.c.h.b16 %v744
    %v1033 = vunpack.c.l.b16 %v745
    %v1034 = vunpack.c.h.b16 %v745
    %v1035 = vunpack.c.l.b16 %v746
    %v1036 = vunpack.c.h.b16 %v746
    %v1037 = vunpack.c.l.b16 %v747
    %v1038 = vunpack.c.h.b16 %v747
    %v1039 = vunpack.c.l.b16 %v748
    %v1040 = vunpack.c.h.b16 %v748
    %v1041 = vunpack.c.l.b16 %v749
    %v1042 = vunpack.c.h.b16 %v749
    %v1043 = vunpack.c.l.b16 %v750
    %v1044 = vunpack.c.h.b16 %v750
    %v1045 = vunpack.c.l.b16 %v751
    %v1046 = vunpack.c.h.b16 %v751
    %v1047 = vunpack.c.l.b16 %v752
    %v1048 = vunpack.c.h.b16 %v752
    %v1049 = vunpack.c.l.b16 %v753
    %v1050 = vunpack.c.h.b16 %v753
    %v1051 = vunpack.c.l.b16 %v754
    %v1052 = vunpack.c.h.b16 %v754
    %v1053 = vunpack.c.l.b16 %v755
    %v1054 = vunpack.c.h.b16 %v755
    %v1055 = vunpack.c.l.b16 %v756
    %v1056 = vunpack.c.h.b16 %v756
    %v1057 = vunpack.c.l.b16 %v757
    %v1058 = vunpack.c.h.b16 %v757
    %v1059 = vunpack.c.l.b16 %v758
    %v1060 = vunpack.c.h.b16 %v758
    %v1061 = vunpack.c.l.b16 %v759
    %v1062 = vunpack.c.h.b16 %v759
    %v1063 = vunpack.c.l.b16 %v760
    %v1064 = vunpack.c.h.b16 %v760
    %v1065 = vunpack.c.l.b16 %v761
    %v1066 = vunpack.c.h.b16 %v761
    %v1067 = vunpack.c.l.b16 %v762
    %v1068 = vunpack.c.h.b16 %v762
    %v1069 = vunpack.c.l.b16 %v763
    %v1070 = vunpack.c.h.b16 %v763
    %v1071 = vunpack.c.l.b16 %v764
    %v1072 = vunpack.c.h.b16 %v764
    %v1073 = vunpack.c.l.b16 %v765
    %v1074 = vunpack.c.h.b16 %v765
    %v1075 = vunpack.c.l.b16 %v766
    %v1076 = vunpack.c.h.b16 %v766
    %v1077 = vunpack.c.l.b16 %v767
    %v1078 = vunpack.c.h.b16 %v767
    %v1079 = vunpack.c.l.b16 %v768
    %v1080 = vunpack.c.h.b16 %v768
    %v1081 = vunpack.c.l.b16 %v769
    %v1082 = vunpack.c.h.b16 %v769
    %v1083 = vunpack.c.l.b16 %v770
    %v1084 = vunpack.c.h.b16 %v770
    %v1085 = vunpack.c.l.b16 %v771
    %v1086 = vunpack.c.h.b16 %v771
    %v1087 = vunpack.c.l.b16 %v772
    %v1088 = vunpack.c.h.b16 %v772
    %v1089 = vunpack.c.l.b16 %v773
    %v1090 = vunpack.c.h.b16 %v773
    %v1091 = vunpack.c.l.b16 %v774
    %v1092 = vunpack.c.h.b16 %v774
    %v1093 = vunpack.c.l.b16 %v775
    %v1094 = vunpack.c.h.b16 %v775
    %v1095 = vunpack.c.l.b16 %v776
    %v1096 = vunpack.c.h.b16 %v776
    %v1097 = vunpack.c.l.b16 %v777
    %v1098 = vunpack.c.h.b16 %v777
    %v1099 = vunpack.c.l.b16 %v778
    %v1100 = vunpack.c.h.b16 %v778
    %v1101 = vunpack.c.l.b16 %v779
    %v1102 = vunpack.c.h.b16 %v779
    %v1103 = vunpack.c.l.b16 %v780
    %v1104 = vunpack.c.h.b16 %v780
    %v1105 = vunpack.c.l.b16 %v781
    %v1106 = vunpack.c.h.b16 %v781
    %v1107 = vunpack.c.l.b16 %v782
    %v1108 = vunpack.c.h.b16 %v782
    %v1109 = vunpack.c.l.b16 %v783
    %v1110 = vunpack.c.h.b16 %v783
    %v1111 = vunpack.c.l.b16 %v784
    %v1112 = vunpack.c.h.b16 %v784
    %v1113 = vunpack.c.l.b16 %v785
    %v1114 = vunpack.c.h.b16 %v785
    %v1115 = vunpack.c.l.b16 %v786
    %v1116 = vunpack.c.h.b16 %v786
    %v1117 = vunpack.c.l.b16 %v787
    %v1118 = vunpack.c.h.b16 %v787
    %v1119 = vunpack.c.l.b16 %v788
    %v1120 = vunpack.c.h.b16 %v788
    %v1121 = vunpack.c.l.b16 %v789
    %v1122 = vunpack.c.h.b16 %v789
    %v1123 = vunpack.c.l.b16 %v790
    %v1124 = vunpack.c.h.b16 %v790
    %v1125 = vunpack.c.l.b16 %v791
    %v1126 = vunpack.c.h.b16 %v791
    %v1127 = vunpack.c.l.b16 %v792
    %v1128 = vunpack.c.h.b16 %v792
    %v1129 = vunpack.c.l.b16 %v793
    %v1130 = vunpack.c.h.b16 %v793
    %v1131 = vunpack.c.l.b16 %v794
    %v1132 = vunpack.c.h.b16 %v794
    %v1133 = vunpack.c.l.b16 %v795
    %v1134 = vunpack.c.h.b16 %v795
    %v1135 = vunpack.c.l.b16 %v796
    %v1136 = vunpack.c.h.b16 %v796
    %v1137 = vunpack.c.l.b16 %v797
    %v1138 = vunpack.c.h.b16 %v797
    %v1139 = vunpack.c.l.b16 %v798
    %v1140 = vunpack.c.h.b16 %v798
    %v1141 = vunpack.c.l.b16 %v799
    %v1142 = vunpack.c.h.b16 %v799
    %v1143 = vunpack.c.l.b16 %v800
    %v1144 = vunpack.c.h.b16 %v800
    %v1145 = vunpack.c.l.b16 %v801
    %v1146 = vunpack.c.h.b16 %v801
    %v1147 = vunpack.c.l.b16 %v802
    %v1148 = vunpack.c.h.b16 %v802
    %v1149 = vunpack.c.l.b16 %v803
    %v1150 = vunpack.c.h.b16 %v803
    %v1151 = vunpack.c.l.b16 %v804
    %v1152 = vunpack.c.h.b16 %v804
    %v1153 = vunpack.c.l.b16 %v805
    %v1154 = vunpack.c.h.b16 %v805
    %v1155 = vunpack.c.l.b16 %v806
    %v1156 = vunpack.c.h.b16 %v806
    %v1157 = vunpack.c.l.b16 %v807
    %v1158 = vunpack.c.h.b16 %v807
    %v1159 = vunpack.c.l.b16 %v808
    %v1160 = vunpack.c.h.b16 %v808
    %v1161 = vunpack.c.l.b16 %v809
    %v1162 = vunpack.c.h.b16 %v809
    %v1163 = vunpack.c.l.b16 %v810
    %v1164 = vunpack.c.h.b16 %v810
    %v1165 = vunpack.c.l.b16 %v811
    %v1166 = vunpack.c.h.b16 %v811
    %v1167 = vunpack.c.l.b16 %v812
    %v1168 = vunpack.c.h.b16 %v812
    %v1169 = vunpack.c.l.b16 %v813
    %v1170 = vunpack.c.h.b16 %v813
    %v1171 = vunpack.c.l.b16 %v814
    %v1172 = vunpack.c.h.b16 %v814
    %v1173 = vunpack.c.l.b16 %v815
    %v1174 = vunpack.c.h.b16 %v815
    %v1175 = vunpack.c.l.b16 %v816
    %v1176 = vunpack.c.h.b16 %v816
    %v1177 = vunpack.c.l.b16 %v817
    %v1178 = vunpack.c.h.b16 %v817
    %v1179 = vunpack.c.l.b16 %v818
    %v1180 = vunpack.c.h.b16 %v818
    %v1181 = vunpack.c.l.b16 %v819
    %v1182 = vunpack.c.h.b16 %v819
    %v1183 = vunpack.c.l.b16 %v820
    %v1184 = vunpack.c.h.b16 %v820
    %v1185 = vunpack.c.l.b16 %v821
    %v1186 = vunpack.c.h.b16 %v821
    %v1187 = vunpack.c.l.b16 %v822
    %v1188 = vunpack.c.h.b16 %v822
    %v1189 = vunpack.c.l.b16 %v823
    %v1190 = vunpack.c.h.b16 %v823
    %v1191 = vunpack.c.l.b16 %v824
    %v1192 = vunpack.c.h.b16 %v824
    %v1193 = vunpack.c.l.b16 %v825
    %v1194 = vunpack.c.h.b16 %v825
    %v1195 = vunpack.c.l.b16 %v826
    %v1196 = vunpack.c.h.b16 %v826
    %v1197 = vunpack.c.l.b16 %v827
    %v1198 = vunpack.c.h.b16 %v827
    %v1199 = vunpack.c.l.b16 %v828
    %v1200 = vunpack.c.h.b16 %v828
    %v1201 = vunpack.c.l.b16 %v829
    %v1202 = vunpack.c.h.b16 %v829
    %v1203 = vunpack.c.l.b16 %v830
    %v1204 = vunpack.c.h.b16 %v830
    %v1205 = vunpack.c.l.b16 %v831
    %v1206 = vunpack.c.h.b16 %v831
    %v1207 = vunpack.c.l.b16 %v832
    %v1208 = vunpack.c.h.b16 %v832
    %v1209 = vunpack.c.l.b16 %v833
    %v1210 = vunpack.c.h.b16 %v833
    %v1211 = vunpack.c.l.b16 %v834
    %v1212 = vunpack.c.h.b16 %v834
    %v1213 = vunpack.c.l.b16 %v835
    %v1214 = vunpack.c.h.b16 %v835
    %v1215 = vunpack.c.l.b16 %v836
    %v1216 = vunpack.c.h.b16 %v836
    %v1217 = vunpack.c.l.b16 %v837
    %v1218 = vunpack.c.h.b16 %v837
    %v1219 = vunpack.c.l.b16 %v838
    %v1220 = vunpack.c.h.b16 %v838
    %v1221 = vunpack.c.l.b16 %v839
    %v1222 = vunpack.c.h.b16 %v839
    %v1223 = vunpack.c.l.b16 %v840
    %v1224 = vunpack.c.h.b16 %v840
    %v1225 = vunpack.c.l.b16 %v841
    %v1226 = vunpack.c.h.b16 %v841
    %v1227 = vunpack.c.l.b16 %v842
    %v1228 = vunpack.c.h.b16 %v842
    %v1229 = vunpack.c.l.b16 %v843
    %v1230 = vunpack.c.h.b16 %v843
    %v1231 = vunpack.c.l.b16 %v844
    %v1232 = vunpack.c.h.b16 %v844
    %v1233 = vunpack.c.l.b16 %v845
    %v1234 = vunpack.c.h.b16 %v845
    %v1235 = vunpack.c.l.b16 %v846
    %v1236 = vunpack.c.h.b16 %v846
    %v1237 = vunpack.c.l.b16 %v847
    %v1238 = vunpack.c.h.b16 %v847
    %v1239 = vunpack.c.l.b16 %v848
    %v1240 = vunpack.c.h.b16 %v848
    %v1241 = vunpack.c.l.b16 %v849
    %v1242 = vunpack.c.h.b16 %v849
    %v1243 = vunpack.c.l.b16 %v850
    %v1244 = vunpack.c.h.b16 %v850
    %v1245 = vunpack.c.l.b16 %v851
    %v1246 = vunpack.c.h.b16 %v851
    %v1247 = vunpack.c.l.b16 %v852
    %v1248 = vunpack.c.h.b16 %v852
    %v1249 = vunpack.c.l.b16 %v853
    %v1250 = vunpack.c.h.b16 %v853
    %v1251 = vunpack.c.l.b16 %v854
    %v1252 = vunpack.c.h.b16 %v854
    %v1253 = vunpack.c.l.b16 %v855
    %v1254 = vunpack.c.h.b16 %v855
    %v1255 = vunpack.c.l.b16 %v856
    %v1256 = vunpack.c.h.b16 %v856
    %v1257 = vunpack.c.l.b16 %v857
    %v1258 = vunpack.c.h.b16 %v857
    %v1259 = vunpack.c.l.b16 %v858
    %v1260 = vunpack.c.h.b16 %v858
    %v1261 = vunpack.c.l.b16 %v859
    %v1262 = vunpack.c.h.b16 %v859
    %v1263 = vunpack.c.l.b16 %v860
    %v1264 = vunpack.c.h.b16 %v860
    %v1265 = vunpack.c.l.b16 %v861
    %v1266 = vunpack.c.h.b16 %v861
    %v1267 = vunpack.c.l.b16 %v862
    %v1268 = vunpack.c.h.b16 %v862
    %v1269 = vpack.c.b16 %v1017, %v1013
    %v1270 = vpack.c.b16 %v1018, %v1014
    %v1271 = vpack.c.b16 %v1019, %v1015
    %v1272 = vpack.c.b16 %v1020, %v1016
    %v1273 = vpack.c.b16 %v1025, %v1021
    %v1274 = vpack.c.b16 %v1026, %v1022
    %v1275 = vpack.c.b16 %v1027, %v1023
    %v1276 = vpack.c.b16 %v1028, %v1024
    %v1277 = vpack.c.b16 %v1033, %v1029
    %v1278 = vpack.c.b16 %v1034, %v1030
    %v1279 = vpack.c.b16 %v1035, %v1031
    %v1280 = vpack.c.b16 %v1036, %v1032
    %v1281 = vpack.c.b16 %v1041, %v1037
    %v1282 = vpack.c.b16 %v1042, %v1038
    %v1283 = vpack.c.b16 %v1043, %v1039
    %v1284 = vpack.c.b16 %v1044, %v1040
    %v1285 = vpack.c.b16 %v1049, %v1045
    %v1286 = vpack.c.b16 %v1050, %v1046
    %v1287 = vpack.c.b16 %v1051, %v1047
    %v1288 = vpack.c.b16 %v1052, %v1048
    %v1289 = vpack.c.b16 %v1057, %v1053
    %v1290 = vpack.c.b16 %v1058, %v1054
    %v1291 = vpack.c.b16 %v1059, %v1055
    %v1292 = vpack.c.b16 %v1060, %v1056
    %v1293 = vpack.c.b16 %v1065, %v1061
    %v1294 = vpack.c.b16 %v1066, %v1062
    %v1295 = vpack.c.b16 %v1067, %v1063
    %v1296 = vpack.c.b16 %v1068, %v1064
    %v1297 = vpack.c.b16 %v1073, %v1069
    %v1298 = vpack.c.b16 %v1074, %v1070
    %v1299 = vpack.c.b16 %v1075, %v1071
    %v1300 = vpack.c.b16 %v1076, %v1072
    %v1301 = vpack.c.b16 %v1081, %v1077
    %v1302 = vpack.c.b16 %v1082, %v1078
    %v1303 = vpack.c.b16 %v1083, %v1079
    %v1304 = vpack.c.b16 %v1084, %v1080
    %v1305 = vpack.c.b16 %v1089, %v1085
    %v1306 = vpack.c.b16 %v1090, %v1086
    %v1307 = vpack.c.b16 %v1091, %v1087
    %v1308 = vpack.c.b16 %v1092, %v1088
    %v1309 = vpack.c.b16 %v1097, %v1093
    %v1310 = vpack.c.b16 %v1098, %v1094
    %v1311 = vpack.c.b16 %v1099, %v1095
    %v1312 = vpack.c.b16 %v1100, %v1096
    %v1313 = vpack.c.b16 %v1105, %v1101
    %v1314 = vpack.c.b16 %v1106, %v1102
    %v1315 = vpack.c.b16 %v1107, %v1103
    %v1316 = vpack.c.b16 %v1108, %v1104
    %v1317 = vpack.c.b16 %v1113, %v1109
    %v1318 = vpack.c.b16 %v1114, %v1110
    %v1319 = vpack.c.b16 %v1115, %v1111
    %v1320 = vpack.c.b16 %v1116, %v1112
    %v1321 = vpack.c.b16 %v1121, %v1117
    %v1322 = vpack.c.b16 %v1122, %v1118
    %v1323 = vpack.c.b16 %v1123, %v1119
    %v1324 = vpack.c.b16 %v1124, %v1120
    %v1325 = vpack.c.b16 %v1129, %v1125
    %v1326 = vpack.c.b16 %v1130, %v1126
    %v1327 = vpack.c.b16 %v1131, %v1127
    %v1328 = vpack.c.b16 %v1132, %v1128
    %v1329 = vpack.c.b16 %v1137, %v1133
    %v1330 = vpack.c.b16 %v1138, %v1134
    %v1331 = vpack.c.b16 %v1139, %v1135
    %v1332 = vpack.c.b16 %v1140, %v1136
    %v1333 = vpack.c.b16 %v1145, %v1141
    %v1334 = vpack.c.b16 %v1146, %v1142
    %v1335 = vpack.c.b16 %v1147, %v1143
    %v1336 = vpack.c.b16 %v1148, %v1144
    %v1337 = vpack.c.b16 %v1153, %v1149
    %v1338 = vpack.c.b16 %v1154, %v1150
    %v1339 = vpack.c.b16 %v1155, %v1151
    %v1340 = vpack.c.b16 %v1156, %v1152
    %v1341 = vpack.c.b16 %v1161, %v1157
    %v1342 = vpack.c.b16 %v1162, %v1158
    %v1343 = vpack.c.b16 %v1163, %v1159
    %v1344 = vpack.c.b16 %v1164, %v1160
    %v1345 = vpack.c.b16 %v1169, %v1165
    %v1346 = vpack.c.b16 %v1170, %v1166
    %v1347 = vpack.c.b16 %v1171, %v1167
    %v1348 = vpack.c.b16 %v1172, %v1168
    %v1349 = vpack.c.b16 %v1177, %v1173
    %v1350 = vpack.c.b16 %v1178, %v1174
    %v1351 = vpack.c.b16 %v1179, %v1175
    %v1352 = vpack.c.b16 %v1180, %v1176
    %v1353 = vpack.c.b16 %v1185, %v1181
    %v1354 = vpack.c.b16 %v1186, %v1182
    %v1355 = vpack.c.b16 %v1187, %v1183
    %v1356 = vpack.c.b16 %v1188, %v1184
    %v1357 = vpack.c.b16 %v1193, %v1189
    %v1358 = vpack.c.b16 %v1194, %v1190
    %v1359 = vpack.c.b16 %v1195, %v1191
    %v1360 = vpack.c.b16 %v1196, %v1192
    %v1361 = vpack.c.b16 %v1201, %v1197
    %v1362 = vpack.c.b16 %v1202, %v1198
    %v1363 = vpack.c.b16 %v1203, %v1199
    %v1364 = vpack.c.b16 %v1204, %v1200
    %v1365 = vpack.c.b16 %v1209, %v1205
    %v1366 = vpack.c.b16 %v1210, %v1206
    %v1367 = vpack.c.b16 %v1211, %v1207
    %v1368 = vpack.c.b16 %v1212, %v1208
    %v1369 = vpack.c.b16 %v1217, %v1213
    %v1370 = vpack.c.b16 %v1218, %v1214
    %v1371 = vpack.c.b16 %v1219, %v1215
    %v1372 = vpack.c.b16 %v1220, %v1216
    %v1373 = vpack.c.b16 %v1225, %v1221
    %v1374 = vpack.c.b16 %v1226, %v1222
    %v1375 = vpack.c.b16 %v1227, %v1223
    %v1376 = vpack.c.b16 %v1228, %v1224
    %v1377 = vpack.c.b16 %v1233, %v1229
    %v1378 = vpack.c.b16 %v1234, %v1230
    %v1379 = vpack.c.b16 %v1235, %v1231
    %v1380 = vpack.c.b16 %v1236, %v1232
    %v1381 = vpack.c.b16 %v1241, %v1237
    %v1382 = vpack.c.b16 %v1242, %v1238
    %v1383 = vpack.c.b16 %v1243, %v1239
    %v1384 = vpack.c.b16 %v1244, %v1240
    %v1385 = vpack.c.b16 %v1249, %v1245
    %v1386 = vpack.c.b16 %v1250, %v1246
    %v1387 = vpack.c.b16 %v1251, %v1247
    %v1388 = vpack.c.b16 %v1252, %v1248
    %v1389 = vpack.c.b16 %v1257, %v1253
    %v1390 = vpack.c.b16 %v1258, %v1254
    %v1391 = vpack.c.b16 %v1259, %v1255
    %v1392 = vpack.c.b16 %v1260, %v1256
    %v1393 = vpack.c.b16 %v1265, %v1261
    %v1394 = vpack.c.b16 %v1266, %v1262
    %v1395 = vpack.c.b16 %v1267, %v1263
    %v1396 = vpack.c.b16 %v1268, %v1264
    %1525 = vmatprep.subr.bf16.mxu0 %v1298
    %1526 = vmatpush1.bf16.msra.mxu0 %v1297
    %1527 = vmatprep.subr.bf16.mxu0 %v1294
    %1528 = vmatpush1.bf16.msra.mxu0 %v1293
    %1529 = vmatprep.subr.bf16.mxu0 %v1290
    %1530 = vmatpush1.bf16.msra.mxu0 %v1289
    %1531 = vmatprep.subr.bf16.mxu0 %v1286
    %1532 = vmatpush1.bf16.msra.mxu0 %v1285
    %1533 = vmatprep.subr.bf16.mxu0 %v1282
    %1534 = vmatpush1.bf16.msra.mxu0 %v1281
    %1535 = vmatprep.subr.bf16.mxu0 %v1278
    %1536 = vmatpush1.bf16.msra.mxu0 %v1277
    %1537 = vmatprep.subr.bf16.mxu0 %v1274
    %1538 = vmatpush1.bf16.msra.mxu0 %v1273
    %1539 = vmatprep.subr.bf16.mxu0 %v1270
    %1540 = vmatpush1.bf16.msra.mxu0 %v1269
    %1541 = vmatprep.subr.bf16.mxu0 %v1330
    %1542 = vmatpush2.bf16.msra.mxu0 %v1329
    %1543 = vmatprep.subr.bf16.mxu0 %v1326
    %1544 = vmatpush2.bf16.msra.mxu0 %v1325
    %1545 = vmatprep.subr.bf16.mxu0 %v1322
    %1546 = vmatpush2.bf16.msra.mxu0 %v1321
    %1547 = vmatprep.subr.bf16.mxu0 %v1318
    %1548 = vmatpush2.bf16.msra.mxu0 %v1317
    %1549 = vmatprep.subr.bf16.mxu0 %v1314
    %1550 = vmatpush2.bf16.msra.mxu0 %v1313
    %1551 = vmatprep.subr.bf16.mxu0 %v1310
    %1552 = vmatpush2.bf16.msra.mxu0 %v1309
    %1553 = vmatprep.subr.bf16.mxu0 %v1306
    %1554 = vmatpush2.bf16.msra.mxu0 %v1305
    %1555 = vmatprep.subr.bf16.mxu0 %v1302
    %1556 = vmatpush2.bf16.msra.mxu0 %v1301
    %1557 = vmatprep.mubr.bf16.mxu0 %v728
    %1558 = vmatmul.mubr.bf16.gmra.mxu0 %v727
    %v1559 = vpop.f32.mrf.mxu0
    %v1560 = vadd.f32 %v868, %v1559
    %v1561 = vpop.f32.mrf.mxu0
    %v1562 = vadd.f32 %v872, %v1561
    %v1563 = vpop.f32.mrf.mxu0
    %v1564 = vpop.f32.mrf.mxu0
    %1565 = vdwg.mxu0
    %1566 = vmatprep.subr.bf16.mxu0 %v1362
    %1567 = vmatpush1.bf16.msra.mxu0 %v1361
    %1568 = vmatprep.subr.bf16.mxu0 %v1358
    %1569 = vmatpush1.bf16.msra.mxu0 %v1357
    %1570 = vmatprep.subr.bf16.mxu0 %v1354
    %1571 = vmatpush1.bf16.msra.mxu0 %v1353
    %1572 = vmatprep.subr.bf16.mxu0 %v1350
    %1573 = vmatpush1.bf16.msra.mxu0 %v1349
    %1574 = vmatprep.subr.bf16.mxu0 %v1346
    %1575 = vmatpush1.bf16.msra.mxu0 %v1345
    %1576 = vmatprep.subr.bf16.mxu0 %v1342
    %1577 = vmatpush1.bf16.msra.mxu0 %v1341
    %1578 = vmatprep.subr.bf16.mxu0 %v1338
    %1579 = vmatpush1.bf16.msra.mxu0 %v1337
    %1580 = vmatprep.subr.bf16.mxu0 %v1334
    %1581 = vmatpush1.bf16.msra.mxu0 %v1333
    %1582 = vmatprep.subr.bf16.mxu0 %v1394
    %1583 = vmatpush2.bf16.msra.mxu0 %v1393
    %1584 = vmatprep.subr.bf16.mxu0 %v1390
    %1585 = vmatpush2.bf16.msra.mxu0 %v1389
    %1586 = vmatprep.subr.bf16.mxu0 %v1386
    %1587 = vmatpush2.bf16.msra.mxu0 %v1385
    %1588 = vmatprep.subr.bf16.mxu0 %v1382
    %1589 = vmatpush2.bf16.msra.mxu0 %v1381
    %1590 = vmatprep.subr.bf16.mxu0 %v1378
    %1591 = vmatpush2.bf16.msra.mxu0 %v1377
    %1592 = vmatprep.subr.bf16.mxu0 %v1374
    %1593 = vmatpush2.bf16.msra.mxu0 %v1373
    %1594 = vmatprep.subr.bf16.mxu0 %v1370
    %1595 = vmatpush2.bf16.msra.mxu0 %v1369
    %1596 = vmatprep.subr.bf16.mxu0 %v1366
    %1597 = vmatpush2.bf16.msra.mxu0 %v1365
    %1598 = vmatprep.mubr.bf16.mxu0 %v730
    %1599 = vmatmul.mubr.bf16.gmra.mxu0 %v729
    %v1600 = vpop.f32.mrf.mxu0
    %v1601 = vadd.f32 %v1560, %v1600
    %v1602 = vpop.f32.mrf.mxu0
    %v1603 = vadd.f32 %v1562, %v1602
    %v1604 = vpop.f32.mrf.mxu0
    %v1605 = vpop.f32.mrf.mxu0
    %1606 = vdwg.mxu0
    %1607 = vmatprep.subr.bf16.mxu0 %v1300
    %1608 = vmatpush1.bf16.msra.mxu0 %v1299
    %1609 = vmatprep.subr.bf16.mxu0 %v1296
    %1610 = vmatpush1.bf16.msra.mxu0 %v1295
    %1611 = vmatprep.subr.bf16.mxu0 %v1292
    %1612 = vmatpush1.bf16.msra.mxu0 %v1291
    %1613 = vmatprep.subr.bf16.mxu0 %v1288
    %1614 = vmatpush1.bf16.msra.mxu0 %v1287
    %1615 = vmatprep.subr.bf16.mxu0 %v1284
    %1616 = vmatpush1.bf16.msra.mxu0 %v1283
    %1617 = vmatprep.subr.bf16.mxu0 %v1280
    %1618 = vmatpush1.bf16.msra.mxu0 %v1279
    %1619 = vmatprep.subr.bf16.mxu0 %v1276
    %1620 = vmatpush1.bf16.msra.mxu0 %v1275
    %1621 = vmatprep.subr.bf16.mxu0 %v1272
    %1622 = vmatpush1.bf16.msra.mxu0 %v1271
    %1623 = vmatprep.subr.bf16.mxu0 %v1332
    %1624 = vmatpush2.bf16.msra.mxu0 %v1331
    %1625 = vmatprep.subr.bf16.mxu0 %v1328
    %1626 = vmatpush2.bf16.msra.mxu0 %v1327
    %1627 = vmatprep.subr.bf16.mxu0 %v1324
    %1628 = vmatpush2.bf16.msra.mxu0 %v1323
    %1629 = vmatprep.subr.bf16.mxu0 %v1320
    %1630 = vmatpush2.bf16.msra.mxu0 %v1319
    %1631 = vmatprep.subr.bf16.mxu0 %v1316
    %1632 = vmatpush2.bf16.msra.mxu0 %v1315
    %1633 = vmatprep.subr.bf16.mxu0 %v1312
    %1634 = vmatpush2.bf16.msra.mxu0 %v1311
    %1635 = vmatprep.subr.bf16.mxu0 %v1308
    %1636 = vmatpush2.bf16.msra.mxu0 %v1307
    %1637 = vmatprep.subr.bf16.mxu0 %v1304
    %1638 = vmatpush2.bf16.msra.mxu0 %v1303
    %1639 = vmatprep.mubr.bf16.mxu0 %v728
    %1640 = vmatmul.mubr.bf16.gmra.mxu0 %v727
    %v1641 = vpop.f32.mrf.mxu0
    %v1642 = vadd.f32 %v876, %v1641
    %v1643 = vpop.f32.mrf.mxu0
    %v1644 = vadd.f32 %v880, %v1643
    %v1645 = vpop.f32.mrf.mxu0
    %v1646 = vpop.f32.mrf.mxu0
    %1647 = vdwg.mxu0
    %1648 = vmatprep.subr.bf16.mxu0 %v1364
    %1649 = vmatpush1.bf16.msra.mxu0 %v1363
    %1650 = vmatprep.subr.bf16.mxu0 %v1360
    %1651 = vmatpush1.bf16.msra.mxu0 %v1359
    %1652 = vmatprep.subr.bf16.mxu0 %v1356
    %1653 = vmatpush1.bf16.msra.mxu0 %v1355
    %1654 = vmatprep.subr.bf16.mxu0 %v1352
    %1655 = vmatpush1.bf16.msra.mxu0 %v1351
    %1656 = vmatprep.subr.bf16.mxu0 %v1348
    %1657 = vmatpush1.bf16.msra.mxu0 %v1347
    %1658 = vmatprep.subr.bf16.mxu0 %v1344
    %1659 = vmatpush1.bf16.msra.mxu0 %v1343
    %1660 = vmatprep.subr.bf16.mxu0 %v1340
    %1661 = vmatpush1.bf16.msra.mxu0 %v1339
    %1662 = vmatprep.subr.bf16.mxu0 %v1336
    %1663 = vmatpush1.bf16.msra.mxu0 %v1335
    %1664 = vmatprep.subr.bf16.mxu0 %v1396
    %1665 = vmatpush2.bf16.msra.mxu0 %v1395
    %1666 = vmatprep.subr.bf16.mxu0 %v1392
    %1667 = vmatpush2.bf16.msra.mxu0 %v1391
    %1668 = vmatprep.subr.bf16.mxu0 %v1388
    %1669 = vmatpush2.bf16.msra.mxu0 %v1387
    %1670 = vmatprep.subr.bf16.mxu0 %v1384
    %1671 = vmatpush2.bf16.msra.mxu0 %v1383
    %1672 = vmatprep.subr.bf16.mxu0 %v1380
    %1673 = vmatpush2.bf16.msra.mxu0 %v1379
    %1674 = vmatprep.subr.bf16.mxu0 %v1376
    %1675 = vmatpush2.bf16.msra.mxu0 %v1375
    %1676 = vmatprep.subr.bf16.mxu0 %v1372
    %1677 = vmatpush2.bf16.msra.mxu0 %v1371
    %1678 = vmatprep.subr.bf16.mxu0 %v1368
    %1679 = vmatpush2.bf16.msra.mxu0 %v1367
    %1680 = vmatprep.mubr.bf16.mxu0 %v730
    %1681 = vmatmul.mubr.bf16.gmra.mxu0 %v729
    %v1682 = vpop.f32.mrf.mxu0
    %v1683 = vadd.f32 %v1642, %v1682
    %v1684 = vpop.f32.mrf.mxu0
    %v1685 = vadd.f32 %v1644, %v1684
    %v1686 = vpop.f32.mrf.mxu0
    %v1687 = vpop.f32.mrf.mxu0
    %1688 = vdwg.mxu0
    %v1689 = vmax.f32 %v1601, 0.0
    %v1690 = vmax.f32 %v1603, 0.0
    %v1691 = vmax.f32 %v1683, 0.0
    %v1692 = vmax.f32 %v1685, 0.0
    %v1693 = vld [vmem:[#allocation10] sm:$0xff]
    %v1694 = vld [vmem:[#allocation10 + $0x8] sm:$0xff]
    %v1695 = vld [vmem:[#allocation10 + $0x10] sm:$0xff]
    %v1696 = vld [vmem:[#allocation10 + $0x18] sm:$0xff]
    %v1697 = vld [vmem:[#allocation10 + $0x20] sm:$0xff]
    %v1698 = vld [vmem:[#allocation10 + $0x28] sm:$0xff]
    %v1699 = vld [vmem:[#allocation10 + $0x30] sm:$0xff]
    %v1700 = vld [vmem:[#allocation10 + $0x38] sm:$0xff]
    %v1701 = vld [vmem:[#allocation10 + $0x40] sm:$0xff]
    %v1702 = vld [vmem:[#allocation10 + $0x48] sm:$0xff]
    %v1703 = vld [vmem:[#allocation10 + $0x50] sm:$0xff]
    %v1704 = vld [vmem:[#allocation10 + $0x58] sm:$0xff]
    %v1705 = vld [vmem:[#allocation10 + $0x60] sm:$0xff]
    %v1706 = vld [vmem:[#allocation10 + $0x68] sm:$0xff]
    %v1707 = vld [vmem:[#allocation10 + $0x70] sm:$0xff]
    %v1708 = vld [vmem:[#allocation10 + $0x78] sm:$0xff]
    %v1709 = vld [vmem:[#allocation10 + $0x80] sm:$0xff]
    %v1710 = vld [vmem:[#allocation10 + $0x88] sm:$0xff]
    %v1711 = vld [vmem:[#allocation10 + $0x90] sm:$0xff]
    %v1712 = vld [vmem:[#allocation10 + $0x98] sm:$0xff]
    %v1713 = vld [vmem:[#allocation10 + $0xa0] sm:$0xff]
    %v1714 = vld [vmem:[#allocation10 + $0xa8] sm:$0xff]
    %v1715 = vld [vmem:[#allocation10 + $0xb0] sm:$0xff]
    %v1716 = vld [vmem:[#allocation10 + $0xb8] sm:$0xff]
    %v1717 = vld [vmem:[#allocation10 + $0xc0] sm:$0xff]
    %v1718 = vld [vmem:[#allocation10 + $0xc8] sm:$0xff]
    %v1719 = vld [vmem:[#allocation10 + $0xd0] sm:$0xff]
    %v1720 = vld [vmem:[#allocation10 + $0xd8] sm:$0xff]
    %v1721 = vld [vmem:[#allocation10 + $0xe0] sm:$0xff]
    %v1722 = vld [vmem:[#allocation10 + $0xe8] sm:$0xff]
    %v1723 = vld [vmem:[#allocation10 + $0xf0] sm:$0xff]
    %v1724 = vld [vmem:[#allocation10 + $0xf8] sm:$0xff]
    %v1725 = vld [vmem:[#allocation10 + $0x100] sm:$0xff]
    %v1726 = vld [vmem:[#allocation10 + $0x108] sm:$0xff]
    %v1727 = vld [vmem:[#allocation10 + $0x110] sm:$0xff]
    %v1728 = vld [vmem:[#allocation10 + $0x118] sm:$0xff]
    %v1729 = vld [vmem:[#allocation10 + $0x120] sm:$0xff]
    %v1730 = vld [vmem:[#allocation10 + $0x128] sm:$0xff]
    %v1731 = vld [vmem:[#allocation10 + $0x130] sm:$0xff]
    %v1732 = vld [vmem:[#allocation10 + $0x138] sm:$0xff]
    %v1733 = vld [vmem:[#allocation10 + $0x140] sm:$0xff]
    %v1734 = vld [vmem:[#allocation10 + $0x148] sm:$0xff]
    %v1735 = vld [vmem:[#allocation10 + $0x150] sm:$0xff]
    %v1736 = vld [vmem:[#allocation10 + $0x158] sm:$0xff]
    %v1737 = vld [vmem:[#allocation10 + $0x160] sm:$0xff]
    %v1738 = vld [vmem:[#allocation10 + $0x168] sm:$0xff]
    %v1739 = vld [vmem:[#allocation10 + $0x170] sm:$0xff]
    %v1740 = vld [vmem:[#allocation10 + $0x178] sm:$0xff]
    %v1741 = vld [vmem:[#allocation10 + $0x180] sm:$0xff]
    %v1742 = vld [vmem:[#allocation10 + $0x188] sm:$0xff]
    %v1743 = vld [vmem:[#allocation10 + $0x190] sm:$0xff]
    %v1744 = vld [vmem:[#allocation10 + $0x198] sm:$0xff]
    %v1745 = vld [vmem:[#allocation10 + $0x1a0] sm:$0xff]
    %v1746 = vld [vmem:[#allocation10 + $0x1a8] sm:$0xff]
    %v1747 = vld [vmem:[#allocation10 + $0x1b0] sm:$0xff]
    %v1748 = vld [vmem:[#allocation10 + $0x1b8] sm:$0xff]
    %v1749 = vld [vmem:[#allocation10 + $0x1c0] sm:$0xff]
    %v1750 = vld [vmem:[#allocation10 + $0x1c8] sm:$0xff]
    %v1751 = vld [vmem:[#allocation10 + $0x1d0] sm:$0xff]
    %v1752 = vld [vmem:[#allocation10 + $0x1d8] sm:$0xff]
    %v1753 = vld [vmem:[#allocation10 + $0x1e0] sm:$0xff]
    %v1754 = vld [vmem:[#allocation10 + $0x1e8] sm:$0xff]
    %v1755 = vld [vmem:[#allocation10 + $0x1f0] sm:$0xff]
    %v1756 = vld [vmem:[#allocation10 + $0x1f8] sm:$0xff]
    %v1757 = vld [vmem:[#allocation10 + $0x200] sm:$0xff]
    %v1758 = vld [vmem:[#allocation10 + $0x208] sm:$0xff]
    %v1759 = vld [vmem:[#allocation10 + $0x210] sm:$0xff]
    %v1760 = vld [vmem:[#allocation10 + $0x218] sm:$0xff]
    %v1761 = vld [vmem:[#allocation10 + $0x220] sm:$0xff]
    %v1762 = vld [vmem:[#allocation10 + $0x228] sm:$0xff]
    %v1763 = vld [vmem:[#allocation10 + $0x230] sm:$0xff]
    %v1764 = vld [vmem:[#allocation10 + $0x238] sm:$0xff]
    %v1765 = vld [vmem:[#allocation10 + $0x240] sm:$0xff]
    %v1766 = vld [vmem:[#allocation10 + $0x248] sm:$0xff]
    %v1767 = vld [vmem:[#allocation10 + $0x250] sm:$0xff]
    %v1768 = vld [vmem:[#allocation10 + $0x258] sm:$0xff]
    %v1769 = vld [vmem:[#allocation10 + $0x260] sm:$0xff]
    %v1770 = vld [vmem:[#allocation10 + $0x268] sm:$0xff]
    %v1771 = vld [vmem:[#allocation10 + $0x270] sm:$0xff]
    %v1772 = vld [vmem:[#allocation10 + $0x278] sm:$0xff]
    %v1773 = vld [vmem:[#allocation10 + $0x280] sm:$0xff]
    %v1774 = vld [vmem:[#allocation10 + $0x288] sm:$0xff]
    %v1775 = vld [vmem:[#allocation10 + $0x290] sm:$0xff]
    %v1776 = vld [vmem:[#allocation10 + $0x298] sm:$0xff]
    %v1777 = vld [vmem:[#allocation10 + $0x2a0] sm:$0xff]
    %v1778 = vld [vmem:[#allocation10 + $0x2a8] sm:$0xff]
    %v1779 = vld [vmem:[#allocation10 + $0x2b0] sm:$0xff]
    %v1780 = vld [vmem:[#allocation10 + $0x2b8] sm:$0xff]
    %v1781 = vld [vmem:[#allocation10 + $0x2c0] sm:$0xff]
    %v1782 = vld [vmem:[#allocation10 + $0x2c8] sm:$0xff]
    %v1783 = vld [vmem:[#allocation10 + $0x2d0] sm:$0xff]
    %v1784 = vld [vmem:[#allocation10 + $0x2d8] sm:$0xff]
    %v1785 = vld [vmem:[#allocation10 + $0x2e0] sm:$0xff]
    %v1786 = vld [vmem:[#allocation10 + $0x2e8] sm:$0xff]
    %v1787 = vld [vmem:[#allocation10 + $0x2f0] sm:$0xff]
    %v1788 = vld [vmem:[#allocation10 + $0x2f8] sm:$0xff]
    %v1789 = vld [vmem:[#allocation10 + $0x300] sm:$0xff]
    %v1790 = vld [vmem:[#allocation10 + $0x308] sm:$0xff]
    %v1791 = vld [vmem:[#allocation10 + $0x310] sm:$0xff]
    %v1792 = vld [vmem:[#allocation10 + $0x318] sm:$0xff]
    %v1793 = vld [vmem:[#allocation10 + $0x320] sm:$0xff]
    %v1794 = vld [vmem:[#allocation10 + $0x328] sm:$0xff]
    %v1795 = vld [vmem:[#allocation10 + $0x330] sm:$0xff]
    %v1796 = vld [vmem:[#allocation10 + $0x338] sm:$0xff]
    %v1797 = vld [vmem:[#allocation10 + $0x340] sm:$0xff]
    %v1798 = vld [vmem:[#allocation10 + $0x348] sm:$0xff]
    %v1799 = vld [vmem:[#allocation10 + $0x350] sm:$0xff]
    %v1800 = vld [vmem:[#allocation10 + $0x358] sm:$0xff]
    %v1801 = vld [vmem:[#allocation10 + $0x360] sm:$0xff]
    %v1802 = vld [vmem:[#allocation10 + $0x368] sm:$0xff]
    %v1803 = vld [vmem:[#allocation10 + $0x370] sm:$0xff]
    %v1804 = vld [vmem:[#allocation10 + $0x378] sm:$0xff]
    %v1805 = vld [vmem:[#allocation10 + $0x380] sm:$0xff]
    %v1806 = vld [vmem:[#allocation10 + $0x388] sm:$0xff]
    %v1807 = vld [vmem:[#allocation10 + $0x390] sm:$0xff]
    %v1808 = vld [vmem:[#allocation10 + $0x398] sm:$0xff]
    %v1809 = vld [vmem:[#allocation10 + $0x3a0] sm:$0xff]
    %v1810 = vld [vmem:[#allocation10 + $0x3a8] sm:$0xff]
    %v1811 = vld [vmem:[#allocation10 + $0x3b0] sm:$0xff]
    %v1812 = vld [vmem:[#allocation10 + $0x3b8] sm:$0xff]
    %v1813 = vld [vmem:[#allocation10 + $0x3c0] sm:$0xff]
    %v1814 = vld [vmem:[#allocation10 + $0x3c8] sm:$0xff]
    %v1815 = vld [vmem:[#allocation10 + $0x3d0] sm:$0xff]
    %v1816 = vld [vmem:[#allocation10 + $0x3d8] sm:$0xff]
    %v1817 = vld [vmem:[#allocation10 + $0x3e0] sm:$0xff]
    %v1818 = vld [vmem:[#allocation10 + $0x3e8] sm:$0xff]
    %v1819 = vld [vmem:[#allocation10 + $0x3f0] sm:$0xff]
    %v1820 = vld [vmem:[#allocation10 + $0x3f8] sm:$0xff]
    %v1821 = vld [vmem:[%s6] sm:$0xf]
    %v1823 = vlaneseq
    %v1824 = vshrl.u32 %v1823, 7
    %v1825 = vsub.s32 0, %v1824
    %v1826 = vrot.slane %v1821, %v1825
    %v1827 = vlaneseq
    %v1828 = vshrl.u32 %v1827, 7
    %v1829 = vsub.s32 1, %v1828
    %v1830 = vrot.slane %v1821, %v1829
    %v1831 = vlaneseq
    %v1832 = vshrl.u32 %v1831, 7
    %v1833 = vsub.s32 2, %v1832
    %v1834 = vrot.slane %v1821, %v1833
    %v1835 = vlaneseq
    %v1836 = vshrl.u32 %v1835, 7
    %v1837 = vsub.s32 3, %v1836
    %v1838 = vrot.slane %v1821, %v1837
    %v1971 = vunpack.c.l.b16 %v1693
    %v1972 = vunpack.c.h.b16 %v1693
    %v1973 = vunpack.c.l.b16 %v1694
    %v1974 = vunpack.c.h.b16 %v1694
    %v1975 = vunpack.c.l.b16 %v1695
    %v1976 = vunpack.c.h.b16 %v1695
    %v1977 = vunpack.c.l.b16 %v1696
    %v1978 = vunpack.c.h.b16 %v1696
    %v1979 = vunpack.c.l.b16 %v1697
    %v1980 = vunpack.c.h.b16 %v1697
    %v1981 = vunpack.c.l.b16 %v1698
    %v1982 = vunpack.c.h.b16 %v1698
    %v1983 = vunpack.c.l.b16 %v1699
    %v1984 = vunpack.c.h.b16 %v1699
    %v1985 = vunpack.c.l.b16 %v1700
    %v1986 = vunpack.c.h.b16 %v1700
    %v1987 = vunpack.c.l.b16 %v1701
    %v1988 = vunpack.c.h.b16 %v1701
    %v1989 = vunpack.c.l.b16 %v1702
    %v1990 = vunpack.c.h.b16 %v1702
    %v1991 = vunpack.c.l.b16 %v1703
    %v1992 = vunpack.c.h.b16 %v1703
    %v1993 = vunpack.c.l.b16 %v1704
    %v1994 = vunpack.c.h.b16 %v1704
    %v1995 = vunpack.c.l.b16 %v1705
    %v1996 = vunpack.c.h.b16 %v1705
    %v1997 = vunpack.c.l.b16 %v1706
    %v1998 = vunpack.c.h.b16 %v1706
    %v1999 = vunpack.c.l.b16 %v1707
    %v2000 = vunpack.c.h.b16 %v1707
    %v2001 = vunpack.c.l.b16 %v1708
    %v2002 = vunpack.c.h.b16 %v1708
    %v2003 = vunpack.c.l.b16 %v1709
    %v2004 = vunpack.c.h.b16 %v1709
    %v2005 = vunpack.c.l.b16 %v1710
    %v2006 = vunpack.c.h.b16 %v1710
    %v2007 = vunpack.c.l.b16 %v1711
    %v2008 = vunpack.c.h.b16 %v1711
    %v2009 = vunpack.c.l.b16 %v1712
    %v2010 = vunpack.c.h.b16 %v1712
    %v2011 = vunpack.c.l.b16 %v1713
    %v2012 = vunpack.c.h.b16 %v1713
    %v2013 = vunpack.c.l.b16 %v1714
    %v2014 = vunpack.c.h.b16 %v1714
    %v2015 = vunpack.c.l.b16 %v1715
    %v2016 = vunpack.c.h.b16 %v1715
    %v2017 = vunpack.c.l.b16 %v1716
    %v2018 = vunpack.c.h.b16 %v1716
    %v2019 = vunpack.c.l.b16 %v1717
    %v2020 = vunpack.c.h.b16 %v1717
    %v2021 = vunpack.c.l.b16 %v1718
    %v2022 = vunpack.c.h.b16 %v1718
    %v2023 = vunpack.c.l.b16 %v1719
    %v2024 = vunpack.c.h.b16 %v1719
    %v2025 = vunpack.c.l.b16 %v1720
    %v2026 = vunpack.c.h.b16 %v1720
    %v2027 = vunpack.c.l.b16 %v1721
    %v2028 = vunpack.c.h.b16 %v1721
    %v2029 = vunpack.c.l.b16 %v1722
    %v2030 = vunpack.c.h.b16 %v1722
    %v2031 = vunpack.c.l.b16 %v1723
    %v2032 = vunpack.c.h.b16 %v1723
    %v2033 = vunpack.c.l.b16 %v1724
    %v2034 = vunpack.c.h.b16 %v1724
    %v2035 = vunpack.c.l.b16 %v1725
    %v2036 = vunpack.c.h.b16 %v1725
    %v2037 = vunpack.c.l.b16 %v1726
    %v2038 = vunpack.c.h.b16 %v1726
    %v2039 = vunpack.c.l.b16 %v1727
    %v2040 = vunpack.c.h.b16 %v1727
    %v2041 = vunpack.c.l.b16 %v1728
    %v2042 = vunpack.c.h.b16 %v1728
    %v2043 = vunpack.c.l.b16 %v1729
    %v2044 = vunpack.c.h.b16 %v1729
    %v2045 = vunpack.c.l.b16 %v1730
    %v2046 = vunpack.c.h.b16 %v1730
    %v2047 = vunpack.c.l.b16 %v1731
    %v2048 = vunpack.c.h.b16 %v1731
    %v2049 = vunpack.c.l.b16 %v1732
    %v2050 = vunpack.c.h.b16 %v1732
    %v2051 = vunpack.c.l.b16 %v1733
    %v2052 = vunpack.c.h.b16 %v1733
    %v2053 = vunpack.c.l.b16 %v1734
    %v2054 = vunpack.c.h.b16 %v1734
    %v2055 = vunpack.c.l.b16 %v1735
    %v2056 = vunpack.c.h.b16 %v1735
    %v2057 = vunpack.c.l.b16 %v1736
    %v2058 = vunpack.c.h.b16 %v1736
    %v2059 = vunpack.c.l.b16 %v1737
    %v2060 = vunpack.c.h.b16 %v1737
    %v2061 = vunpack.c.l.b16 %v1738
    %v2062 = vunpack.c.h.b16 %v1738
    %v2063 = vunpack.c.l.b16 %v1739
    %v2064 = vunpack.c.h.b16 %v1739
    %v2065 = vunpack.c.l.b16 %v1740
    %v2066 = vunpack.c.h.b16 %v1740
    %v2067 = vunpack.c.l.b16 %v1741
    %v2068 = vunpack.c.h.b16 %v1741
    %v2069 = vunpack.c.l.b16 %v1742
    %v2070 = vunpack.c.h.b16 %v1742
    %v2071 = vunpack.c.l.b16 %v1743
    %v2072 = vunpack.c.h.b16 %v1743
    %v2073 = vunpack.c.l.b16 %v1744
    %v2074 = vunpack.c.h.b16 %v1744
    %v2075 = vunpack.c.l.b16 %v1745
    %v2076 = vunpack.c.h.b16 %v1745
    %v2077 = vunpack.c.l.b16 %v1746
    %v2078 = vunpack.c.h.b16 %v1746
    %v2079 = vunpack.c.l.b16 %v1747
    %v2080 = vunpack.c.h.b16 %v1747
    %v2081 = vunpack.c.l.b16 %v1748
    %v2082 = vunpack.c.h.b16 %v1748
    %v2083 = vunpack.c.l.b16 %v1749
    %v2084 = vunpack.c.h.b16 %v1749
    %v2085 = vunpack.c.l.b16 %v1750
    %v2086 = vunpack.c.h.b16 %v1750
    %v2087 = vunpack.c.l.b16 %v1751
    %v2088 = vunpack.c.h.b16 %v1751
    %v2089 = vunpack.c.l.b16 %v1752
    %v2090 = vunpack.c.h.b16 %v1752
    %v2091 = vunpack.c.l.b16 %v1753
    %v2092 = vunpack.c.h.b16 %v1753
    %v2093 = vunpack.c.l.b16 %v1754
    %v2094 = vunpack.c.h.b16 %v1754
    %v2095 = vunpack.c.l.b16 %v1755
    %v2096 = vunpack.c.h.b16 %v1755
    %v2097 = vunpack.c.l.b16 %v1756
    %v2098 = vunpack.c.h.b16 %v1756
    %v2099 = vunpack.c.l.b16 %v1757
    %v2100 = vunpack.c.h.b16 %v1757
    %v2101 = vunpack.c.l.b16 %v1758
    %v2102 = vunpack.c.h.b16 %v1758
    %v2103 = vunpack.c.l.b16 %v1759
    %v2104 = vunpack.c.h.b16 %v1759
    %v2105 = vunpack.c.l.b16 %v1760
    %v2106 = vunpack.c.h.b16 %v1760
    %v2107 = vunpack.c.l.b16 %v1761
    %v2108 = vunpack.c.h.b16 %v1761
    %v2109 = vunpack.c.l.b16 %v1762
    %v2110 = vunpack.c.h.b16 %v1762
    %v2111 = vunpack.c.l.b16 %v1763
    %v2112 = vunpack.c.h.b16 %v1763
    %v2113 = vunpack.c.l.b16 %v1764
    %v2114 = vunpack.c.h.b16 %v1764
    %v2115 = vunpack.c.l.b16 %v1765
    %v2116 = vunpack.c.h.b16 %v1765
    %v2117 = vunpack.c.l.b16 %v1766
    %v2118 = vunpack.c.h.b16 %v1766
    %v2119 = vunpack.c.l.b16 %v1767
    %v2120 = vunpack.c.h.b16 %v1767
    %v2121 = vunpack.c.l.b16 %v1768
    %v2122 = vunpack.c.h.b16 %v1768
    %v2123 = vunpack.c.l.b16 %v1769
    %v2124 = vunpack.c.h.b16 %v1769
    %v2125 = vunpack.c.l.b16 %v1770
    %v2126 = vunpack.c.h.b16 %v1770
    %v2127 = vunpack.c.l.b16 %v1771
    %v2128 = vunpack.c.h.b16 %v1771
    %v2129 = vunpack.c.l.b16 %v1772
    %v2130 = vunpack.c.h.b16 %v1772
    %v2131 = vunpack.c.l.b16 %v1773
    %v2132 = vunpack.c.h.b16 %v1773
    %v2133 = vunpack.c.l.b16 %v1774
    %v2134 = vunpack.c.h.b16 %v1774
    %v2135 = vunpack.c.l.b16 %v1775
    %v2136 = vunpack.c.h.b16 %v1775
    %v2137 = vunpack.c.l.b16 %v1776
    %v2138 = vunpack.c.h.b16 %v1776
    %v2139 = vunpack.c.l.b16 %v1777
    %v2140 = vunpack.c.h.b16 %v1777
    %v2141 = vunpack.c.l.b16 %v1778
    %v2142 = vunpack.c.h.b16 %v1778
    %v2143 = vunpack.c.l.b16 %v1779
    %v2144 = vunpack.c.h.b16 %v1779
    %v2145 = vunpack.c.l.b16 %v1780
    %v2146 = vunpack.c.h.b16 %v1780
    %v2147 = vunpack.c.l.b16 %v1781
    %v2148 = vunpack.c.h.b16 %v1781
    %v2149 = vunpack.c.l.b16 %v1782
    %v2150 = vunpack.c.h.b16 %v1782
    %v2151 = vunpack.c.l.b16 %v1783
    %v2152 = vunpack.c.h.b16 %v1783
    %v2153 = vunpack.c.l.b16 %v1784
    %v2154 = vunpack.c.h.b16 %v1784
    %v2155 = vunpack.c.l.b16 %v1785
    %v2156 = vunpack.c.h.b16 %v1785
    %v2157 = vunpack.c.l.b16 %v1786
    %v2158 = vunpack.c.h.b16 %v1786
    %v2159 = vunpack.c.l.b16 %v1787
    %v2160 = vunpack.c.h.b16 %v1787
    %v2161 = vunpack.c.l.b16 %v1788
    %v2162 = vunpack.c.h.b16 %v1788
    %v2163 = vunpack.c.l.b16 %v1789
    %v2164 = vunpack.c.h.b16 %v1789
    %v2165 = vunpack.c.l.b16 %v1790
    %v2166 = vunpack.c.h.b16 %v1790
    %v2167 = vunpack.c.l.b16 %v1791
    %v2168 = vunpack.c.h.b16 %v1791
    %v2169 = vunpack.c.l.b16 %v1792
    %v2170 = vunpack.c.h.b16 %v1792
    %v2171 = vunpack.c.l.b16 %v1793
    %v2172 = vunpack.c.h.b16 %v1793
    %v2173 = vunpack.c.l.b16 %v1794
    %v2174 = vunpack.c.h.b16 %v1794
    %v2175 = vunpack.c.l.b16 %v1795
    %v2176 = vunpack.c.h.b16 %v1795
    %v2177 = vunpack.c.l.b16 %v1796
    %v2178 = vunpack.c.h.b16 %v1796
    %v2179 = vunpack.c.l.b16 %v1797
    %v2180 = vunpack.c.h.b16 %v1797
    %v2181 = vunpack.c.l.b16 %v1798
    %v2182 = vunpack.c.h.b16 %v1798
    %v2183 = vunpack.c.l.b16 %v1799
    %v2184 = vunpack.c.h.b16 %v1799
    %v2185 = vunpack.c.l.b16 %v1800
    %v2186 = vunpack.c.h.b16 %v1800
    %v2187 = vunpack.c.l.b16 %v1801
    %v2188 = vunpack.c.h.b16 %v1801
    %v2189 = vunpack.c.l.b16 %v1802
    %v2190 = vunpack.c.h.b16 %v1802
    %v2191 = vunpack.c.l.b16 %v1803
    %v2192 = vunpack.c.h.b16 %v1803
    %v2193 = vunpack.c.l.b16 %v1804
    %v2194 = vunpack.c.h.b16 %v1804
    %v2195 = vunpack.c.l.b16 %v1805
    %v2196 = vunpack.c.h.b16 %v1805
    %v2197 = vunpack.c.l.b16 %v1806
    %v2198 = vunpack.c.h.b16 %v1806
    %v2199 = vunpack.c.l.b16 %v1807
    %v2200 = vunpack.c.h.b16 %v1807
    %v2201 = vunpack.c.l.b16 %v1808
    %v2202 = vunpack.c.h.b16 %v1808
    %v2203 = vunpack.c.l.b16 %v1809
    %v2204 = vunpack.c.h.b16 %v1809
    %v2205 = vunpack.c.l.b16 %v1810
    %v2206 = vunpack.c.h.b16 %v1810
    %v2207 = vunpack.c.l.b16 %v1811
    %v2208 = vunpack.c.h.b16 %v1811
    %v2209 = vunpack.c.l.b16 %v1812
    %v2210 = vunpack.c.h.b16 %v1812
    %v2211 = vunpack.c.l.b16 %v1813
    %v2212 = vunpack.c.h.b16 %v1813
    %v2213 = vunpack.c.l.b16 %v1814
    %v2214 = vunpack.c.h.b16 %v1814
    %v2215 = vunpack.c.l.b16 %v1815
    %v2216 = vunpack.c.h.b16 %v1815
    %v2217 = vunpack.c.l.b16 %v1816
    %v2218 = vunpack.c.h.b16 %v1816
    %v2219 = vunpack.c.l.b16 %v1817
    %v2220 = vunpack.c.h.b16 %v1817
    %v2221 = vunpack.c.l.b16 %v1818
    %v2222 = vunpack.c.h.b16 %v1818
    %v2223 = vunpack.c.l.b16 %v1819
    %v2224 = vunpack.c.h.b16 %v1819
    %v2225 = vunpack.c.l.b16 %v1820
    %v2226 = vunpack.c.h.b16 %v1820
    %v2227 = vpack.c.b16 %v1975, %v1971
    %v2228 = vpack.c.b16 %v1976, %v1972
    %v2229 = vpack.c.b16 %v1977, %v1973
    %v2230 = vpack.c.b16 %v1978, %v1974
    %v2231 = vpack.c.b16 %v1983, %v1979
    %v2232 = vpack.c.b16 %v1984, %v1980
    %v2233 = vpack.c.b16 %v1985, %v1981
    %v2234 = vpack.c.b16 %v1986, %v1982
    %v2235 = vpack.c.b16 %v1991, %v1987
    %v2236 = vpack.c.b16 %v1992, %v1988
    %v2237 = vpack.c.b16 %v1993, %v1989
    %v2238 = vpack.c.b16 %v1994, %v1990
    %v2239 = vpack.c.b16 %v1999, %v1995
    %v2240 = vpack.c.b16 %v2000, %v1996
    %v2241 = vpack.c.b16 %v2001, %v1997
    %v2242 = vpack.c.b16 %v2002, %v1998
    %v2243 = vpack.c.b16 %v2007, %v2003
    %v2244 = vpack.c.b16 %v2008, %v2004
    %v2245 = vpack.c.b16 %v2009, %v2005
    %v2246 = vpack.c.b16 %v2010, %v2006
    %v2247 = vpack.c.b16 %v2015, %v2011
    %v2248 = vpack.c.b16 %v2016, %v2012
    %v2249 = vpack.c.b16 %v2017, %v2013
    %v2250 = vpack.c.b16 %v2018, %v2014
    %v2251 = vpack.c.b16 %v2023, %v2019
    %v2252 = vpack.c.b16 %v2024, %v2020
    %v2253 = vpack.c.b16 %v2025, %v2021
    %v2254 = vpack.c.b16 %v2026, %v2022
    %v2255 = vpack.c.b16 %v2031, %v2027
    %v2256 = vpack.c.b16 %v2032, %v2028
    %v2257 = vpack.c.b16 %v2033, %v2029
    %v2258 = vpack.c.b16 %v2034, %v2030
    %v2259 = vpack.c.b16 %v2039, %v2035
    %v2260 = vpack.c.b16 %v2040, %v2036
    %v2261 = vpack.c.b16 %v2041, %v2037
    %v2262 = vpack.c.b16 %v2042, %v2038
    %v2263 = vpack.c.b16 %v2047, %v2043
    %v2264 = vpack.c.b16 %v2048, %v2044
    %v2265 = vpack.c.b16 %v2049, %v2045
    %v2266 = vpack.c.b16 %v2050, %v2046
    %v2267 = vpack.c.b16 %v2055, %v2051
    %v2268 = vpack.c.b16 %v2056, %v2052
    %v2269 = vpack.c.b16 %v2057, %v2053
    %v2270 = vpack.c.b16 %v2058, %v2054
    %v2271 = vpack.c.b16 %v2063, %v2059
    %v2272 = vpack.c.b16 %v2064, %v2060
    %v2273 = vpack.c.b16 %v2065, %v2061
    %v2274 = vpack.c.b16 %v2066, %v2062
    %v2275 = vpack.c.b16 %v2071, %v2067
    %v2276 = vpack.c.b16 %v2072, %v2068
    %v2277 = vpack.c.b16 %v2073, %v2069
    %v2278 = vpack.c.b16 %v2074, %v2070
    %v2279 = vpack.c.b16 %v2079, %v2075
    %v2280 = vpack.c.b16 %v2080, %v2076
    %v2281 = vpack.c.b16 %v2081, %v2077
    %v2282 = vpack.c.b16 %v2082, %v2078
    %v2283 = vpack.c.b16 %v2087, %v2083
    %v2284 = vpack.c.b16 %v2088, %v2084
    %v2285 = vpack.c.b16 %v2089, %v2085
    %v2286 = vpack.c.b16 %v2090, %v2086
    %v2287 = vpack.c.b16 %v2095, %v2091
    %v2288 = vpack.c.b16 %v2096, %v2092
    %v2289 = vpack.c.b16 %v2097, %v2093
    %v2290 = vpack.c.b16 %v2098, %v2094
    %v2291 = vpack.c.b16 %v2103, %v2099
    %v2292 = vpack.c.b16 %v2104, %v2100
    %v2293 = vpack.c.b16 %v2105, %v2101
    %v2294 = vpack.c.b16 %v2106, %v2102
    %v2295 = vpack.c.b16 %v2111, %v2107
    %v2296 = vpack.c.b16 %v2112, %v2108
    %v2297 = vpack.c.b16 %v2113, %v2109
    %v2298 = vpack.c.b16 %v2114, %v2110
    %v2299 = vpack.c.b16 %v2119, %v2115
    %v2300 = vpack.c.b16 %v2120, %v2116
    %v2301 = vpack.c.b16 %v2121, %v2117
    %v2302 = vpack.c.b16 %v2122, %v2118
    %v2303 = vpack.c.b16 %v2127, %v2123
    %v2304 = vpack.c.b16 %v2128, %v2124
    %v2305 = vpack.c.b16 %v2129, %v2125
    %v2306 = vpack.c.b16 %v2130, %v2126
    %v2307 = vpack.c.b16 %v2135, %v2131
    %v2308 = vpack.c.b16 %v2136, %v2132
    %v2309 = vpack.c.b16 %v2137, %v2133
    %v2310 = vpack.c.b16 %v2138, %v2134
    %v2311 = vpack.c.b16 %v2143, %v2139
    %v2312 = vpack.c.b16 %v2144, %v2140
    %v2313 = vpack.c.b16 %v2145, %v2141
    %v2314 = vpack.c.b16 %v2146, %v2142
    %v2315 = vpack.c.b16 %v2151, %v2147
    %v2316 = vpack.c.b16 %v2152, %v2148
    %v2317 = vpack.c.b16 %v2153, %v2149
    %v2318 = vpack.c.b16 %v2154, %v2150
    %v2319 = vpack.c.b16 %v2159, %v2155
    %v2320 = vpack.c.b16 %v2160, %v2156
    %v2321 = vpack.c.b16 %v2161, %v2157
    %v2322 = vpack.c.b16 %v2162, %v2158
    %v2323 = vpack.c.b16 %v2167, %v2163
    %v2324 = vpack.c.b16 %v2168, %v2164
    %v2325 = vpack.c.b16 %v2169, %v2165
    %v2326 = vpack.c.b16 %v2170, %v2166
    %v2327 = vpack.c.b16 %v2175, %v2171
    %v2328 = vpack.c.b16 %v2176, %v2172
    %v2329 = vpack.c.b16 %v2177, %v2173
    %v2330 = vpack.c.b16 %v2178, %v2174
    %v2331 = vpack.c.b16 %v2183, %v2179
    %v2332 = vpack.c.b16 %v2184, %v2180
    %v2333 = vpack.c.b16 %v2185, %v2181
    %v2334 = vpack.c.b16 %v2186, %v2182
    %v2335 = vpack.c.b16 %v2191, %v2187
    %v2336 = vpack.c.b16 %v2192, %v2188
    %v2337 = vpack.c.b16 %v2193, %v2189
    %v2338 = vpack.c.b16 %v2194, %v2190
    %v2339 = vpack.c.b16 %v2199, %v2195
    %v2340 = vpack.c.b16 %v2200, %v2196
    %v2341 = vpack.c.b16 %v2201, %v2197
    %v2342 = vpack.c.b16 %v2202, %v2198
    %v2343 = vpack.c.b16 %v2207, %v2203
    %v2344 = vpack.c.b16 %v2208, %v2204
    %v2345 = vpack.c.b16 %v2209, %v2205
    %v2346 = vpack.c.b16 %v2210, %v2206
    %v2347 = vpack.c.b16 %v2215, %v2211
    %v2348 = vpack.c.b16 %v2216, %v2212
    %v2349 = vpack.c.b16 %v2217, %v2213
    %v2350 = vpack.c.b16 %v2218, %v2214
    %v2351 = vpack.c.b16 %v2223, %v2219
    %v2352 = vpack.c.b16 %v2224, %v2220
    %v2353 = vpack.c.b16 %v2225, %v2221
    %v2354 = vpack.c.b16 %v2226, %v2222
    %2483 = vmatprep.subr.bf16.mxu0 %v2256
    %2484 = vmatpush1.bf16.msra.mxu0 %v2255
    %2485 = vmatprep.subr.bf16.mxu0 %v2252
    %2486 = vmatpush1.bf16.msra.mxu0 %v2251
    %2487 = vmatprep.subr.bf16.mxu0 %v2248
    %2488 = vmatpush1.bf16.msra.mxu0 %v2247
    %2489 = vmatprep.subr.bf16.mxu0 %v2244
    %2490 = vmatpush1.bf16.msra.mxu0 %v2243
    %2491 = vmatprep.subr.bf16.mxu0 %v2240
    %2492 = vmatpush1.bf16.msra.mxu0 %v2239
    %2493 = vmatprep.subr.bf16.mxu0 %v2236
    %2494 = vmatpush1.bf16.msra.mxu0 %v2235
    %2495 = vmatprep.subr.bf16.mxu0 %v2232
    %2496 = vmatpush1.bf16.msra.mxu0 %v2231
    %2497 = vmatprep.subr.bf16.mxu0 %v2228
    %2498 = vmatpush1.bf16.msra.mxu0 %v2227
    %2499 = vmatprep.subr.bf16.mxu0 %v2288
    %2500 = vmatpush2.bf16.msra.mxu0 %v2287
    %2501 = vmatprep.subr.bf16.mxu0 %v2284
    %2502 = vmatpush2.bf16.msra.mxu0 %v2283
    %2503 = vmatprep.subr.bf16.mxu0 %v2280
    %2504 = vmatpush2.bf16.msra.mxu0 %v2279
    %2505 = vmatprep.subr.bf16.mxu0 %v2276
    %2506 = vmatpush2.bf16.msra.mxu0 %v2275
    %2507 = vmatprep.subr.bf16.mxu0 %v2272
    %2508 = vmatpush2.bf16.msra.mxu0 %v2271
    %2509 = vmatprep.subr.bf16.mxu0 %v2268
    %2510 = vmatpush2.bf16.msra.mxu0 %v2267
    %2511 = vmatprep.subr.bf16.mxu0 %v2264
    %2512 = vmatpush2.bf16.msra.mxu0 %v2263
    %2513 = vmatprep.subr.bf16.mxu0 %v2260
    %2514 = vmatpush2.bf16.msra.mxu0 %v2259
    %2515 = vmatprep.mubr.bf16.mxu0 %v732
    %2516 = vmatmul.mubr.bf16.gmra.mxu0 %v731
    %v2517 = vpop.f32.mrf.mxu0
    %v2518 = vadd.f32 %v1826, %v2517
    %v2519 = vpop.f32.mrf.mxu0
    %v2520 = vadd.f32 %v1830, %v2519
    %v2521 = vpop.f32.mrf.mxu0
    %v2522 = vpop.f32.mrf.mxu0
    %2523 = vdwg.mxu0
    %2524 = vmatprep.subr.bf16.mxu0 %v2320
    %2525 = vmatpush1.bf16.msra.mxu0 %v2319
    %2526 = vmatprep.subr.bf16.mxu0 %v2316
    %2527 = vmatpush1.bf16.msra.mxu0 %v2315
    %2528 = vmatprep.subr.bf16.mxu0 %v2312
    %2529 = vmatpush1.bf16.msra.mxu0 %v2311
    %2530 = vmatprep.subr.bf16.mxu0 %v2308
    %2531 = vmatpush1.bf16.msra.mxu0 %v2307
    %2532 = vmatprep.subr.bf16.mxu0 %v2304
    %2533 = vmatpush1.bf16.msra.mxu0 %v2303
    %2534 = vmatprep.subr.bf16.mxu0 %v2300
    %2535 = vmatpush1.bf16.msra.mxu0 %v2299
    %2536 = vmatprep.subr.bf16.mxu0 %v2296
    %2537 = vmatpush1.bf16.msra.mxu0 %v2295
    %2538 = vmatprep.subr.bf16.mxu0 %v2292
    %2539 = vmatpush1.bf16.msra.mxu0 %v2291
    %2540 = vmatprep.subr.bf16.mxu0 %v2352
    %2541 = vmatpush2.bf16.msra.mxu0 %v2351
    %2542 = vmatprep.subr.bf16.mxu0 %v2348
    %2543 = vmatpush2.bf16.msra.mxu0 %v2347
    %2544 = vmatprep.subr.bf16.mxu0 %v2344
    %2545 = vmatpush2.bf16.msra.mxu0 %v2343
    %2546 = vmatprep.subr.bf16.mxu0 %v2340
    %2547 = vmatpush2.bf16.msra.mxu0 %v2339
    %2548 = vmatprep.subr.bf16.mxu0 %v2336
    %2549 = vmatpush2.bf16.msra.mxu0 %v2335
    %2550 = vmatprep.subr.bf16.mxu0 %v2332
    %2551 = vmatpush2.bf16.msra.mxu0 %v2331
    %2552 = vmatprep.subr.bf16.mxu0 %v2328
    %2553 = vmatpush2.bf16.msra.mxu0 %v2327
    %2554 = vmatprep.subr.bf16.mxu0 %v2324
    %2555 = vmatpush2.bf16.msra.mxu0 %v2323
    %2556 = vmatprep.mubr.bf16.mxu0 %v734
    %2557 = vmatmul.mubr.bf16.gmra.mxu0 %v733
    %v2558 = vpop.f32.mrf.mxu0
    %v2559 = vadd.f32 %v2518, %v2558
    %v2560 = vpop.f32.mrf.mxu0
    %v2561 = vadd.f32 %v2520, %v2560
    %v2562 = vpop.f32.mrf.mxu0
    %v2563 = vpop.f32.mrf.mxu0
    %2564 = vdwg.mxu0
    %2565 = vmatprep.subr.bf16.mxu0 %v2258
    %2566 = vmatpush1.bf16.msra.mxu0 %v2257
    %2567 = vmatprep.subr.bf16.mxu0 %v2254
    %2568 = vmatpush1.bf16.msra.mxu0 %v2253
    %2569 = vmatprep.subr.bf16.mxu0 %v2250
    %2570 = vmatpush1.bf16.msra.mxu0 %v2249
    %2571 = vmatprep.subr.bf16.mxu0 %v2246
    %2572 = vmatpush1.bf16.msra.mxu0 %v2245
    %2573 = vmatprep.subr.bf16.mxu0 %v2242
    %2574 = vmatpush1.bf16.msra.mxu0 %v2241
    %2575 = vmatprep.subr.bf16.mxu0 %v2238
    %2576 = vmatpush1.bf16.msra.mxu0 %v2237
    %2577 = vmatprep.subr.bf16.mxu0 %v2234
    %2578 = vmatpush1.bf16.msra.mxu0 %v2233
    %2579 = vmatprep.subr.bf16.mxu0 %v2230
    %2580 = vmatpush1.bf16.msra.mxu0 %v2229
    %2581 = vmatprep.subr.bf16.mxu0 %v2290
    %2582 = vmatpush2.bf16.msra.mxu0 %v2289
    %2583 = vmatprep.subr.bf16.mxu0 %v2286
    %2584 = vmatpush2.bf16.msra.mxu0 %v2285
    %2585 = vmatprep.subr.bf16.mxu0 %v2282
    %2586 = vmatpush2.bf16.msra.mxu0 %v2281
    %2587 = vmatprep.subr.bf16.mxu0 %v2278
    %2588 = vmatpush2.bf16.msra.mxu0 %v2277
    %2589 = vmatprep.subr.bf16.mxu0 %v2274
    %2590 = vmatpush2.bf16.msra.mxu0 %v2273
    %2591 = vmatprep.subr.bf16.mxu0 %v2270
    %2592 = vmatpush2.bf16.msra.mxu0 %v2269
    %2593 = vmatprep.subr.bf16.mxu0 %v2266
    %2594 = vmatpush2.bf16.msra.mxu0 %v2265
    %2595 = vmatprep.subr.bf16.mxu0 %v2262
    %2596 = vmatpush2.bf16.msra.mxu0 %v2261
    %2597 = vmatprep.mubr.bf16.mxu0 %v732
    %2598 = vmatmul.mubr.bf16.gmra.mxu0 %v731
    %v2599 = vpop.f32.mrf.mxu0
    %v2600 = vadd.f32 %v1834, %v2599
    %v2601 = vpop.f32.mrf.mxu0
    %v2602 = vadd.f32 %v1838, %v2601
    %v2603 = vpop.f32.mrf.mxu0
    %v2604 = vpop.f32.mrf.mxu0
    %2605 = vdwg.mxu0
    %2606 = vmatprep.subr.bf16.mxu0 %v2322
    %2607 = vmatpush1.bf16.msra.mxu0 %v2321
    %2608 = vmatprep.subr.bf16.mxu0 %v2318
    %2609 = vmatpush1.bf16.msra.mxu0 %v2317
    %2610 = vmatprep.subr.bf16.mxu0 %v2314
    %2611 = vmatpush1.bf16.msra.mxu0 %v2313
    %2612 = vmatprep.subr.bf16.mxu0 %v2310
    %2613 = vmatpush1.bf16.msra.mxu0 %v2309
    %2614 = vmatprep.subr.bf16.mxu0 %v2306
    %2615 = vmatpush1.bf16.msra.mxu0 %v2305
    %2616 = vmatprep.subr.bf16.mxu0 %v2302
    %2617 = vmatpush1.bf16.msra.mxu0 %v2301
    %2618 = vmatprep.subr.bf16.mxu0 %v2298
    %2619 = vmatpush1.bf16.msra.mxu0 %v2297
    %2620 = vmatprep.subr.bf16.mxu0 %v2294
    %2621 = vmatpush1.bf16.msra.mxu0 %v2293
    %2622 = vmatprep.subr.bf16.mxu0 %v2354
    %2623 = vmatpush2.bf16.msra.mxu0 %v2353
    %2624 = vmatprep.subr.bf16.mxu0 %v2350
    %2625 = vmatpush2.bf16.msra.mxu0 %v2349
    %2626 = vmatprep.subr.bf16.mxu0 %v2346
    %2627 = vmatpush2.bf16.msra.mxu0 %v2345
    %2628 = vmatprep.subr.bf16.mxu0 %v2342
    %2629 = vmatpush2.bf16.msra.mxu0 %v2341
    %2630 = vmatprep.subr.bf16.mxu0 %v2338
    %2631 = vmatpush2.bf16.msra.mxu0 %v2337
    %2632 = vmatprep.subr.bf16.mxu0 %v2334
    %2633 = vmatpush2.bf16.msra.mxu0 %v2333
    %2634 = vmatprep.subr.bf16.mxu0 %v2330
    %2635 = vmatpush2.bf16.msra.mxu0 %v2329
    %2636 = vmatprep.subr.bf16.mxu0 %v2326
    %2637 = vmatpush2.bf16.msra.mxu0 %v2325
    %2638 = vmatprep.mubr.bf16.mxu0 %v734
    %2639 = vmatmul.mubr.bf16.gmra.mxu0 %v733
    %v2640 = vpop.f32.mrf.mxu0
    %v2641 = vadd.f32 %v2600, %v2640
    %v2642 = vpop.f32.mrf.mxu0
    %v2643 = vadd.f32 %v2602, %v2642
    %v2644 = vpop.f32.mrf.mxu0
    %v2645 = vpop.f32.mrf.mxu0
    %2646 = vdwg.mxu0
    %v2647 = vmax.f32 %v2559, 0.0
    %v2648 = vmax.f32 %v2561, 0.0
    %v2649 = vmax.f32 %v2641, 0.0
    %v2650 = vmax.f32 %v2643, 0.0
    %v2651 = vpack.c.bf16 %v1689, %v1689
    %v2652 = vpack.c.bf16 %v1690, %v1690
    %v2653 = vpack.c.bf16 %v1691, %v1691
    %v2654 = vpack.c.bf16 %v1692, %v1692
    %v2655 = vld [vmem:[#allocation11] sm:$0xf]
    %v2656 = vld [vmem:[#allocation11 + $0x4] sm:$0xf]
    %v2657 = vld [vmem:[#allocation11 + $0x8] sm:$0xf]
    %v2658 = vld [vmem:[#allocation11 + $0xc] sm:$0xf]
    %v2659 = vld [vmem:[#allocation11 + $0x10] sm:$0xf]
    %v2660 = vld [vmem:[#allocation11 + $0x14] sm:$0xf]
    %v2661 = vld [vmem:[#allocation11 + $0x18] sm:$0xf]
    %v2662 = vld [vmem:[#allocation11 + $0x1c] sm:$0xf]
    %v2663 = vld [vmem:[#allocation11 + $0x20] sm:$0xf]
    %v2664 = vld [vmem:[#allocation11 + $0x24] sm:$0xf]
    %v2665 = vld [vmem:[#allocation11 + $0x28] sm:$0xf]
    %v2666 = vld [vmem:[#allocation11 + $0x2c] sm:$0xf]
    %v2667 = vld [vmem:[#allocation11 + $0x30] sm:$0xf]
    %v2668 = vld [vmem:[#allocation11 + $0x34] sm:$0xf]
    %v2669 = vld [vmem:[#allocation11 + $0x38] sm:$0xf]
    %v2670 = vld [vmem:[#allocation11 + $0x3c] sm:$0xf]
    %v2671 = vld [vmem:[#allocation11 + $0x40] sm:$0xf]
    %v2672 = vld [vmem:[#allocation11 + $0x44] sm:$0xf]
    %v2673 = vld [vmem:[#allocation11 + $0x48] sm:$0xf]
    %v2674 = vld [vmem:[#allocation11 + $0x4c] sm:$0xf]
    %v2675 = vld [vmem:[#allocation11 + $0x50] sm:$0xf]
    %v2676 = vld [vmem:[#allocation11 + $0x54] sm:$0xf]
    %v2677 = vld [vmem:[#allocation11 + $0x58] sm:$0xf]
    %v2678 = vld [vmem:[#allocation11 + $0x5c] sm:$0xf]
    %v2679 = vld [vmem:[#allocation11 + $0x60] sm:$0xf]
    %v2680 = vld [vmem:[#allocation11 + $0x64] sm:$0xf]
    %v2681 = vld [vmem:[#allocation11 + $0x68] sm:$0xf]
    %v2682 = vld [vmem:[#allocation11 + $0x6c] sm:$0xf]
    %v2683 = vld [vmem:[#allocation11 + $0x70] sm:$0xf]
    %v2684 = vld [vmem:[#allocation11 + $0x74] sm:$0xf]
    %v2685 = vld [vmem:[#allocation11 + $0x78] sm:$0xf]
    %v2686 = vld [vmem:[#allocation11 + $0x7c] sm:$0xf]
    %v2687 = vld [vmem:[#allocation11 + $0x80] sm:$0xf]
    %v2688 = vld [vmem:[#allocation11 + $0x84] sm:$0xf]
    %v2689 = vld [vmem:[#allocation11 + $0x88] sm:$0xf]
    %v2690 = vld [vmem:[#allocation11 + $0x8c] sm:$0xf]
    %v2691 = vld [vmem:[#allocation11 + $0x90] sm:$0xf]
    %v2692 = vld [vmem:[#allocation11 + $0x94] sm:$0xf]
    %v2693 = vld [vmem:[#allocation11 + $0x98] sm:$0xf]
    %v2694 = vld [vmem:[#allocation11 + $0x9c] sm:$0xf]
    %v2695 = vld [vmem:[#allocation11 + $0xa0] sm:$0xf]
    %v2696 = vld [vmem:[#allocation11 + $0xa4] sm:$0xf]
    %v2697 = vld [vmem:[#allocation11 + $0xa8] sm:$0xf]
    %v2698 = vld [vmem:[#allocation11 + $0xac] sm:$0xf]
    %v2699 = vld [vmem:[#allocation11 + $0xb0] sm:$0xf]
    %v2700 = vld [vmem:[#allocation11 + $0xb4] sm:$0xf]
    %v2701 = vld [vmem:[#allocation11 + $0xb8] sm:$0xf]
    %v2702 = vld [vmem:[#allocation11 + $0xbc] sm:$0xf]
    %v2703 = vld [vmem:[#allocation11 + $0xc0] sm:$0xf]
    %v2704 = vld [vmem:[#allocation11 + $0xc4] sm:$0xf]
    %v2705 = vld [vmem:[#allocation11 + $0xc8] sm:$0xf]
    %v2706 = vld [vmem:[#allocation11 + $0xcc] sm:$0xf]
    %v2707 = vld [vmem:[#allocation11 + $0xd0] sm:$0xf]
    %v2708 = vld [vmem:[#allocation11 + $0xd4] sm:$0xf]
    %v2709 = vld [vmem:[#allocation11 + $0xd8] sm:$0xf]
    %v2710 = vld [vmem:[#allocation11 + $0xdc] sm:$0xf]
    %v2711 = vld [vmem:[#allocation11 + $0xe0] sm:$0xf]
    %v2712 = vld [vmem:[#allocation11 + $0xe4] sm:$0xf]
    %v2713 = vld [vmem:[#allocation11 + $0xe8] sm:$0xf]
    %v2714 = vld [vmem:[#allocation11 + $0xec] sm:$0xf]
    %v2715 = vld [vmem:[#allocation11 + $0xf0] sm:$0xf]
    %v2716 = vld [vmem:[#allocation11 + $0xf4] sm:$0xf]
    %v2717 = vld [vmem:[#allocation11 + $0xf8] sm:$0xf]
    %v2718 = vld [vmem:[#allocation11 + $0xfc] sm:$0xf]
    %v2719 = vpack.c.bf16 %v2647, %v2647
    %v2720 = vpack.c.bf16 %v2648, %v2648
    %v2721 = vpack.c.bf16 %v2649, %v2649
    %v2722 = vpack.c.bf16 %v2650, %v2650
    %v2723 = vld [vmem:[#allocation13] sm:$0xf]
    %v2724 = vld [vmem:[#allocation13 + $0x4] sm:$0xf]
    %v2725 = vld [vmem:[#allocation13 + $0x8] sm:$0xf]
    %v2726 = vld [vmem:[#allocation13 + $0xc] sm:$0xf]
    %v2727 = vld [vmem:[#allocation13 + $0x10] sm:$0xf]
    %v2728 = vld [vmem:[#allocation13 + $0x14] sm:$0xf]
    %v2729 = vld [vmem:[#allocation13 + $0x18] sm:$0xf]
    %v2730 = vld [vmem:[#allocation13 + $0x1c] sm:$0xf]
    %v2731 = vld [vmem:[#allocation13 + $0x20] sm:$0xf]
    %v2732 = vld [vmem:[#allocation13 + $0x24] sm:$0xf]
    %v2733 = vld [vmem:[#allocation13 + $0x28] sm:$0xf]
    %v2734 = vld [vmem:[#allocation13 + $0x2c] sm:$0xf]
    %v2735 = vld [vmem:[#allocation13 + $0x30] sm:$0xf]
    %v2736 = vld [vmem:[#allocation13 + $0x34] sm:$0xf]
    %v2737 = vld [vmem:[#allocation13 + $0x38] sm:$0xf]
    %v2738 = vld [vmem:[#allocation13 + $0x3c] sm:$0xf]
    %v2739 = vld [vmem:[#allocation13 + $0x40] sm:$0xf]
    %v2740 = vld [vmem:[#allocation13 + $0x44] sm:$0xf]
    %v2741 = vld [vmem:[#allocation13 + $0x48] sm:$0xf]
    %v2742 = vld [vmem:[#allocation13 + $0x4c] sm:$0xf]
    %v2743 = vld [vmem:[#allocation13 + $0x50] sm:$0xf]
    %v2744 = vld [vmem:[#allocation13 + $0x54] sm:$0xf]
    %v2745 = vld [vmem:[#allocation13 + $0x58] sm:$0xf]
    %v2746 = vld [vmem:[#allocation13 + $0x5c] sm:$0xf]
    %v2747 = vld [vmem:[#allocation13 + $0x60] sm:$0xf]
    %v2748 = vld [vmem:[#allocation13 + $0x64] sm:$0xf]
    %v2749 = vld [vmem:[#allocation13 + $0x68] sm:$0xf]
    %v2750 = vld [vmem:[#allocation13 + $0x6c] sm:$0xf]
    %v2751 = vld [vmem:[#allocation13 + $0x70] sm:$0xf]
    %v2752 = vld [vmem:[#allocation13 + $0x74] sm:$0xf]
    %v2753 = vld [vmem:[#allocation13 + $0x78] sm:$0xf]
    %v2754 = vld [vmem:[#allocation13 + $0x7c] sm:$0xf]
    %v2755 = vld [vmem:[#allocation13 + $0x80] sm:$0xf]
    %v2756 = vld [vmem:[#allocation13 + $0x84] sm:$0xf]
    %v2757 = vld [vmem:[#allocation13 + $0x88] sm:$0xf]
    %v2758 = vld [vmem:[#allocation13 + $0x8c] sm:$0xf]
    %v2759 = vld [vmem:[#allocation13 + $0x90] sm:$0xf]
    %v2760 = vld [vmem:[#allocation13 + $0x94] sm:$0xf]
    %v2761 = vld [vmem:[#allocation13 + $0x98] sm:$0xf]
    %v2762 = vld [vmem:[#allocation13 + $0x9c] sm:$0xf]
    %v2763 = vld [vmem:[#allocation13 + $0xa0] sm:$0xf]
    %v2764 = vld [vmem:[#allocation13 + $0xa4] sm:$0xf]
    %v2765 = vld [vmem:[#allocation13 + $0xa8] sm:$0xf]
    %v2766 = vld [vmem:[#allocation13 + $0xac] sm:$0xf]
    %v2767 = vld [vmem:[#allocation13 + $0xb0] sm:$0xf]
    %v2768 = vld [vmem:[#allocation13 + $0xb4] sm:$0xf]
    %v2769 = vld [vmem:[#allocation13 + $0xb8] sm:$0xf]
    %v2770 = vld [vmem:[#allocation13 + $0xbc] sm:$0xf]
    %v2771 = vld [vmem:[#allocation13 + $0xc0] sm:$0xf]
    %v2772 = vld [vmem:[#allocation13 + $0xc4] sm:$0xf]
    %v2773 = vld [vmem:[#allocation13 + $0xc8] sm:$0xf]
    %v2774 = vld [vmem:[#allocation13 + $0xcc] sm:$0xf]
    %v2775 = vld [vmem:[#allocation13 + $0xd0] sm:$0xf]
    %v2776 = vld [vmem:[#allocation13 + $0xd4] sm:$0xf]
    %v2777 = vld [vmem:[#allocation13 + $0xd8] sm:$0xf]
    %v2778 = vld [vmem:[#allocation13 + $0xdc] sm:$0xf]
    %v2779 = vld [vmem:[#allocation13 + $0xe0] sm:$0xf]
    %v2780 = vld [vmem:[#allocation13 + $0xe4] sm:$0xf]
    %v2781 = vld [vmem:[#allocation13 + $0xe8] sm:$0xf]
    %v2782 = vld [vmem:[#allocation13 + $0xec] sm:$0xf]
    %v2783 = vld [vmem:[#allocation13 + $0xf0] sm:$0xf]
    %v2784 = vld [vmem:[#allocation13 + $0xf4] sm:$0xf]
    %v2785 = vld [vmem:[#allocation13 + $0xf8] sm:$0xf]
    %v2786 = vld [vmem:[#allocation13 + $0xfc] sm:$0xf]
    %v2851 = vunpack.c.l.b16 %v2723
    %v2852 = vunpack.c.l.b16 %v2724
    %v2853 = vunpack.c.l.b16 %v2725
    %v2854 = vunpack.c.l.b16 %v2726
    %v2855 = vunpack.c.l.b16 %v2727
    %v2856 = vunpack.c.l.b16 %v2728
    %v2857 = vunpack.c.l.b16 %v2729
    %v2858 = vunpack.c.l.b16 %v2730
    %v2859 = vunpack.c.l.b16 %v2731
    %v2860 = vunpack.c.l.b16 %v2732
    %v2861 = vunpack.c.l.b16 %v2733
    %v2862 = vunpack.c.l.b16 %v2734
    %v2863 = vunpack.c.l.b16 %v2735
    %v2864 = vunpack.c.l.b16 %v2736
    %v2865 = vunpack.c.l.b16 %v2737
    %v2866 = vunpack.c.l.b16 %v2738
    %v2867 = vunpack.c.l.b16 %v2739
    %v2868 = vunpack.c.l.b16 %v2740
    %v2869 = vunpack.c.l.b16 %v2741
    %v2870 = vunpack.c.l.b16 %v2742
    %v2871 = vunpack.c.l.b16 %v2743
    %v2872 = vunpack.c.l.b16 %v2744
    %v2873 = vunpack.c.l.b16 %v2745
    %v2874 = vunpack.c.l.b16 %v2746
    %v2875 = vunpack.c.l.b16 %v2747
    %v2876 = vunpack.c.l.b16 %v2748
    %v2877 = vunpack.c.l.b16 %v2749
    %v2878 = vunpack.c.l.b16 %v2750
    %v2879 = vunpack.c.l.b16 %v2751
    %v2880 = vunpack.c.l.b16 %v2752
    %v2881 = vunpack.c.l.b16 %v2753
    %v2882 = vunpack.c.l.b16 %v2754
    %v2883 = vunpack.c.l.b16 %v2755
    %v2884 = vunpack.c.l.b16 %v2756
    %v2885 = vunpack.c.l.b16 %v2757
    %v2886 = vunpack.c.l.b16 %v2758
    %v2887 = vunpack.c.l.b16 %v2759
    %v2888 = vunpack.c.l.b16 %v2760
    %v2889 = vunpack.c.l.b16 %v2761
    %v2890 = vunpack.c.l.b16 %v2762
    %v2891 = vunpack.c.l.b16 %v2763
    %v2892 = vunpack.c.l.b16 %v2764
    %v2893 = vunpack.c.l.b16 %v2765
    %v2894 = vunpack.c.l.b16 %v2766
    %v2895 = vunpack.c.l.b16 %v2767
    %v2896 = vunpack.c.l.b16 %v2768
    %v2897 = vunpack.c.l.b16 %v2769
    %v2898 = vunpack.c.l.b16 %v2770
    %v2899 = vunpack.c.l.b16 %v2771
    %v2900 = vunpack.c.l.b16 %v2772
    %v2901 = vunpack.c.l.b16 %v2773
    %v2902 = vunpack.c.l.b16 %v2774
    %v2903 = vunpack.c.l.b16 %v2775
    %v2904 = vunpack.c.l.b16 %v2776
    %v2905 = vunpack.c.l.b16 %v2777
    %v2906 = vunpack.c.l.b16 %v2778
    %v2907 = vunpack.c.l.b16 %v2779
    %v2908 = vunpack.c.l.b16 %v2780
    %v2909 = vunpack.c.l.b16 %v2781
    %v2910 = vunpack.c.l.b16 %v2782
    %v2911 = vunpack.c.l.b16 %v2783
    %v2912 = vunpack.c.l.b16 %v2784
    %v2913 = vunpack.c.l.b16 %v2785
    %v2914 = vunpack.c.l.b16 %v2786
    %v2915 = vpack.c.b16 %v2852, %v2851
    %v2916 = vpack.c.b16 %v2854, %v2853
    %v2917 = vpack.c.b16 %v2856, %v2855
    %v2918 = vpack.c.b16 %v2858, %v2857
    %v2919 = vpack.c.b16 %v2860, %v2859
    %v2920 = vpack.c.b16 %v2862, %v2861
    %v2921 = vpack.c.b16 %v2864, %v2863
    %v2922 = vpack.c.b16 %v2866, %v2865
    %v2923 = vpack.c.b16 %v2868, %v2867
    %v2924 = vpack.c.b16 %v2870, %v2869
    %v2925 = vpack.c.b16 %v2872, %v2871
    %v2926 = vpack.c.b16 %v2874, %v2873
    %v2927 = vpack.c.b16 %v2876, %v2875
    %v2928 = vpack.c.b16 %v2878, %v2877
    %v2929 = vpack.c.b16 %v2880, %v2879
    %v2930 = vpack.c.b16 %v2882, %v2881
    %v2931 = vpack.c.b16 %v2884, %v2883
    %v2932 = vpack.c.b16 %v2886, %v2885
    %v2933 = vpack.c.b16 %v2888, %v2887
    %v2934 = vpack.c.b16 %v2890, %v2889
    %v2935 = vpack.c.b16 %v2892, %v2891
    %v2936 = vpack.c.b16 %v2894, %v2893
    %v2937 = vpack.c.b16 %v2896, %v2895
    %v2938 = vpack.c.b16 %v2898, %v2897
    %v2939 = vpack.c.b16 %v2900, %v2899
    %v2940 = vpack.c.b16 %v2902, %v2901
    %v2941 = vpack.c.b16 %v2904, %v2903
    %v2942 = vpack.c.b16 %v2906, %v2905
    %v2943 = vpack.c.b16 %v2908, %v2907
    %v2944 = vpack.c.b16 %v2910, %v2909
    %v2945 = vpack.c.b16 %v2912, %v2911
    %v2946 = vpack.c.b16 %v2914, %v2913
    %2979 = vmatprep.subr.bf16.mxu0 0
    %2980 = vmatpush1.bf16.msra.mxu0 %v2922
    %2981 = vmatprep.subr.bf16.mxu0 0
    %2982 = vmatpush1.bf16.msra.mxu0 %v2921
    %2983 = vmatprep.subr.bf16.mxu0 0
    %2984 = vmatpush1.bf16.msra.mxu0 %v2920
    %2985 = vmatprep.subr.bf16.mxu0 0
    %2986 = vmatpush1.bf16.msra.mxu0 %v2919
    %2987 = vmatprep.subr.bf16.mxu0 0
    %2988 = vmatpush1.bf16.msra.mxu0 %v2918
    %2989 = vmatprep.subr.bf16.mxu0 0
    %2990 = vmatpush1.bf16.msra.mxu0 %v2917
    %2991 = vmatprep.subr.bf16.mxu0 0
    %2992 = vmatpush1.bf16.msra.mxu0 %v2916
    %2993 = vmatprep.subr.bf16.mxu0 0
    %2994 = vmatpush1.bf16.msra.mxu0 %v2915
    %2995 = vmatprep.subr.bf16.mxu0 0
    %2996 = vmatpush2.bf16.msra.mxu0 %v2930
    %2997 = vmatprep.subr.bf16.mxu0 0
    %2998 = vmatpush2.bf16.msra.mxu0 %v2929
    %2999 = vmatprep.subr.bf16.mxu0 0
    %3000 = vmatpush2.bf16.msra.mxu0 %v2928
    %3001 = vmatprep.subr.bf16.mxu0 0
    %3002 = vmatpush2.bf16.msra.mxu0 %v2927
    %3003 = vmatprep.subr.bf16.mxu0 0
    %3004 = vmatpush2.bf16.msra.mxu0 %v2926
    %3005 = vmatprep.subr.bf16.mxu0 0
    %3006 = vmatpush2.bf16.msra.mxu0 %v2925
    %3007 = vmatprep.subr.bf16.mxu0 0
    %3008 = vmatpush2.bf16.msra.mxu0 %v2924
    %3009 = vmatprep.subr.bf16.mxu0 0
    %3010 = vmatpush2.bf16.msra.mxu0 %v2923
    %3011 = vmatprep.mubr.bf16.mxu0 %v2720
    %3012 = vmatmul.mubr.bf16.gmra.mxu0 %v2719
    %v3013 = vpop.f32.mrf.mxu0
    %v3014 = vadd.f32 0.0, %v3013
    %v3015 = vpop.f32.mrf.mxu0
    %v3016 = vpop.f32.mrf.mxu0
    %v3017 = vpop.f32.mrf.mxu0
    %3018 = vdwg.mxu0
    %3019 = vmatprep.subr.bf16.mxu0 0
    %3020 = vmatpush1.bf16.msra.mxu0 %v2938
    %3021 = vmatprep.subr.bf16.mxu0 0
    %3022 = vmatpush1.bf16.msra.mxu0 %v2937
    %3023 = vmatprep.subr.bf16.mxu0 0
    %3024 = vmatpush1.bf16.msra.mxu0 %v2936
    %3025 = vmatprep.subr.bf16.mxu0 0
    %3026 = vmatpush1.bf16.msra.mxu0 %v2935
    %3027 = vmatprep.subr.bf16.mxu0 0
    %3028 = vmatpush1.bf16.msra.mxu0 %v2934
    %3029 = vmatprep.subr.bf16.mxu0 0
    %3030 = vmatpush1.bf16.msra.mxu0 %v2933
    %3031 = vmatprep.subr.bf16.mxu0 0
    %3032 = vmatpush1.bf16.msra.mxu0 %v2932
    %3033 = vmatprep.subr.bf16.mxu0 0
    %3034 = vmatpush1.bf16.msra.mxu0 %v2931
    %3035 = vmatprep.subr.bf16.mxu0 0
    %3036 = vmatpush2.bf16.msra.mxu0 %v2946
    %3037 = vmatprep.subr.bf16.mxu0 0
    %3038 = vmatpush2.bf16.msra.mxu0 %v2945
    %3039 = vmatprep.subr.bf16.mxu0 0
    %3040 = vmatpush2.bf16.msra.mxu0 %v2944
    %3041 = vmatprep.subr.bf16.mxu0 0
    %3042 = vmatpush2.bf16.msra.mxu0 %v2943
    %3043 = vmatprep.subr.bf16.mxu0 0
    %3044 = vmatpush2.bf16.msra.mxu0 %v2942
    %3045 = vmatprep.subr.bf16.mxu0 0
    %3046 = vmatpush2.bf16.msra.mxu0 %v2941
    %3047 = vmatprep.subr.bf16.mxu0 0
    %3048 = vmatpush2.bf16.msra.mxu0 %v2940
    %3049 = vmatprep.subr.bf16.mxu0 0
    %3050 = vmatpush2.bf16.msra.mxu0 %v2939
    %3051 = vmatprep.mubr.bf16.mxu0 %v2722
    %3052 = vmatmul.mubr.bf16.gmra.mxu0 %v2721
    %v3053 = vpop.f32.mrf.mxu0
    %v3054 = vadd.f32 %v3014, %v3053
    %v3055 = vpop.f32.mrf.mxu0
    %v3056 = vpop.f32.mrf.mxu0
    %v3057 = vpop.f32.mrf.mxu0
    %3058 = vdwg.mxu0
    %v3123 = vunpack.c.l.b16 %v2655
    %v3124 = vunpack.c.l.b16 %v2656
    %v3125 = vunpack.c.l.b16 %v2657
    %v3126 = vunpack.c.l.b16 %v2658
    %v3127 = vunpack.c.l.b16 %v2659
    %v3128 = vunpack.c.l.b16 %v2660
    %v3129 = vunpack.c.l.b16 %v2661
    %v3130 = vunpack.c.l.b16 %v2662
    %v3131 = vunpack.c.l.b16 %v2663
    %v3132 = vunpack.c.l.b16 %v2664
    %v3133 = vunpack.c.l.b16 %v2665
    %v3134 = vunpack.c.l.b16 %v2666
    %v3135 = vunpack.c.l.b16 %v2667
    %v3136 = vunpack.c.l.b16 %v2668
    %v3137 = vunpack.c.l.b16 %v2669
    %v3138 = vunpack.c.l.b16 %v2670
    %v3139 = vunpack.c.l.b16 %v2671
    %v3140 = vunpack.c.l.b16 %v2672
    %v3141 = vunpack.c.l.b16 %v2673
    %v3142 = vunpack.c.l.b16 %v2674
    %v3143 = vunpack.c.l.b16 %v2675
    %v3144 = vunpack.c.l.b16 %v2676
    %v3145 = vunpack.c.l.b16 %v2677
    %v3146 = vunpack.c.l.b16 %v2678
    %v3147 = vunpack.c.l.b16 %v2679
    %v3148 = vunpack.c.l.b16 %v2680
    %v3149 = vunpack.c.l.b16 %v2681
    %v3150 = vunpack.c.l.b16 %v2682
    %v3151 = vunpack.c.l.b16 %v2683
    %v3152 = vunpack.c.l.b16 %v2684
    %v3153 = vunpack.c.l.b16 %v2685
    %v3154 = vunpack.c.l.b16 %v2686
    %v3155 = vunpack.c.l.b16 %v2687
    %v3156 = vunpack.c.l.b16 %v2688
    %v3157 = vunpack.c.l.b16 %v2689
    %v3158 = vunpack.c.l.b16 %v2690
    %v3159 = vunpack.c.l.b16 %v2691
    %v3160 = vunpack.c.l.b16 %v2692
    %v3161 = vunpack.c.l.b16 %v2693
    %v3162 = vunpack.c.l.b16 %v2694
    %v3163 = vunpack.c.l.b16 %v2695
    %v3164 = vunpack.c.l.b16 %v2696
    %v3165 = vunpack.c.l.b16 %v2697
    %v3166 = vunpack.c.l.b16 %v2698
    %v3167 = vunpack.c.l.b16 %v2699
    %v3168 = vunpack.c.l.b16 %v2700
    %v3169 = vunpack.c.l.b16 %v2701
    %v3170 = vunpack.c.l.b16 %v2702
    %v3171 = vunpack.c.l.b16 %v2703
    %v3172 = vunpack.c.l.b16 %v2704
    %v3173 = vunpack.c.l.b16 %v2705
    %v3174 = vunpack.c.l.b16 %v2706
    %v3175 = vunpack.c.l.b16 %v2707
    %v3176 = vunpack.c.l.b16 %v2708
    %v3177 = vunpack.c.l.b16 %v2709
    %v3178 = vunpack.c.l.b16 %v2710
    %v3179 = vunpack.c.l.b16 %v2711
    %v3180 = vunpack.c.l.b16 %v2712
    %v3181 = vunpack.c.l.b16 %v2713
    %v3182 = vunpack.c.l.b16 %v2714
    %v3183 = vunpack.c.l.b16 %v2715
    %v3184 = vunpack.c.l.b16 %v2716
    %v3185 = vunpack.c.l.b16 %v2717
    %v3186 = vunpack.c.l.b16 %v2718
    %v3187 = vpack.c.b16 %v3124, %v3123
    %v3188 = vpack.c.b16 %v3126, %v3125
    %v3189 = vpack.c.b16 %v3128, %v3127
    %v3190 = vpack.c.b16 %v3130, %v3129
    %v3191 = vpack.c.b16 %v3132, %v3131
    %v3192 = vpack.c.b16 %v3134, %v3133
    %v3193 = vpack.c.b16 %v3136, %v3135
    %v3194 = vpack.c.b16 %v3138, %v3137
    %v3195 = vpack.c.b16 %v3140, %v3139
    %v3196 = vpack.c.b16 %v3142, %v3141
    %v3197 = vpack.c.b16 %v3144, %v3143
    %v3198 = vpack.c.b16 %v3146, %v3145
    %v3199 = vpack.c.b16 %v3148, %v3147
    %v3200 = vpack.c.b16 %v3150, %v3149
    %v3201 = vpack.c.b16 %v3152, %v3151
    %v3202 = vpack.c.b16 %v3154, %v3153
    %v3203 = vpack.c.b16 %v3156, %v3155
    %v3204 = vpack.c.b16 %v3158, %v3157
    %v3205 = vpack.c.b16 %v3160, %v3159
    %v3206 = vpack.c.b16 %v3162, %v3161
    %v3207 = vpack.c.b16 %v3164, %v3163
    %v3208 = vpack.c.b16 %v3166, %v3165
    %v3209 = vpack.c.b16 %v3168, %v3167
    %v3210 = vpack.c.b16 %v3170, %v3169
    %v3211 = vpack.c.b16 %v3172, %v3171
    %v3212 = vpack.c.b16 %v3174, %v3173
    %v3213 = vpack.c.b16 %v3176, %v3175
    %v3214 = vpack.c.b16 %v3178, %v3177
    %v3215 = vpack.c.b16 %v3180, %v3179
    %v3216 = vpack.c.b16 %v3182, %v3181
    %v3217 = vpack.c.b16 %v3184, %v3183
    %v3218 = vpack.c.b16 %v3186, %v3185
    %3251 = vmatprep.subr.bf16.mxu0 0
    %3252 = vmatpush1.bf16.msra.mxu0 %v3194
    %3253 = vmatprep.subr.bf16.mxu0 0
    %3254 = vmatpush1.bf16.msra.mxu0 %v3193
    %3255 = vmatprep.subr.bf16.mxu0 0
    %3256 = vmatpush1.bf16.msra.mxu0 %v3192
    %3257 = vmatprep.subr.bf16.mxu0 0
    %3258 = vmatpush1.bf16.msra.mxu0 %v3191
    %3259 = vmatprep.subr.bf16.mxu0 0
    %3260 = vmatpush1.bf16.msra.mxu0 %v3190
    %3261 = vmatprep.subr.bf16.mxu0 0
    %3262 = vmatpush1.bf16.msra.mxu0 %v3189
    %3263 = vmatprep.subr.bf16.mxu0 0
    %3264 = vmatpush1.bf16.msra.mxu0 %v3188
    %3265 = vmatprep.subr.bf16.mxu0 0
    %3266 = vmatpush1.bf16.msra.mxu0 %v3187
    %3267 = vmatprep.subr.bf16.mxu0 0
    %3268 = vmatpush2.bf16.msra.mxu0 %v3202
    %3269 = vmatprep.subr.bf16.mxu0 0
    %3270 = vmatpush2.bf16.msra.mxu0 %v3201
    %3271 = vmatprep.subr.bf16.mxu0 0
    %3272 = vmatpush2.bf16.msra.mxu0 %v3200
    %3273 = vmatprep.subr.bf16.mxu0 0
    %3274 = vmatpush2.bf16.msra.mxu0 %v3199
    %3275 = vmatprep.subr.bf16.mxu0 0
    %3276 = vmatpush2.bf16.msra.mxu0 %v3198
    %3277 = vmatprep.subr.bf16.mxu0 0
    %3278 = vmatpush2.bf16.msra.mxu0 %v3197
    %3279 = vmatprep.subr.bf16.mxu0 0
    %3280 = vmatpush2.bf16.msra.mxu0 %v3196
    %3281 = vmatprep.subr.bf16.mxu0 0
    %3282 = vmatpush2.bf16.msra.mxu0 %v3195
    %3283 = vmatprep.mubr.bf16.mxu0 %v2652
    %3284 = vmatmul.mubr.bf16.gmra.mxu0 %v2651
    %v3285 = vpop.f32.mrf.mxu0
    %v3286 = vadd.f32 %v3054, %v3285
    %v3287 = vpop.f32.mrf.mxu0
    %v3288 = vpop.f32.mrf.mxu0
    %v3289 = vpop.f32.mrf.mxu0
    %3290 = vdwg.mxu0
    %3291 = vmatprep.subr.bf16.mxu0 0
    %3292 = vmatpush1.bf16.msra.mxu0 %v3210
    %3293 = vmatprep.subr.bf16.mxu0 0
    %3294 = vmatpush1.bf16.msra.mxu0 %v3209
    %3295 = vmatprep.subr.bf16.mxu0 0
    %3296 = vmatpush1.bf16.msra.mxu0 %v3208
    %3297 = vmatprep.subr.bf16.mxu0 0
    %3298 = vmatpush1.bf16.msra.mxu0 %v3207
    %3299 = vmatprep.subr.bf16.mxu0 0
    %3300 = vmatpush1.bf16.msra.mxu0 %v3206
    %3301 = vmatprep.subr.bf16.mxu0 0
    %3302 = vmatpush1.bf16.msra.mxu0 %v3205
    %3303 = vmatprep.subr.bf16.mxu0 0
    %3304 = vmatpush1.bf16.msra.mxu0 %v3204
    %3305 = vmatprep.subr.bf16.mxu0 0
    %3306 = vmatpush1.bf16.msra.mxu0 %v3203
    %3307 = vmatprep.subr.bf16.mxu0 0
    %3308 = vmatpush2.bf16.msra.mxu0 %v3218
    %3309 = vmatprep.subr.bf16.mxu0 0
    %3310 = vmatpush2.bf16.msra.mxu0 %v3217
    %3311 = vmatprep.subr.bf16.mxu0 0
    %3312 = vmatpush2.bf16.msra.mxu0 %v3216
    %3313 = vmatprep.subr.bf16.mxu0 0
    %3314 = vmatpush2.bf16.msra.mxu0 %v3215
    %3315 = vmatprep.subr.bf16.mxu0 0
    %3316 = vmatpush2.bf16.msra.mxu0 %v3214
    %3317 = vmatprep.subr.bf16.mxu0 0
    %3318 = vmatpush2.bf16.msra.mxu0 %v3213
    %3319 = vmatprep.subr.bf16.mxu0 0
    %3320 = vmatpush2.bf16.msra.mxu0 %v3212
    %3321 = vmatprep.subr.bf16.mxu0 0
    %3322 = vmatpush2.bf16.msra.mxu0 %v3211
    %3323 = vmatprep.mubr.bf16.mxu0 %v2654
    %3324 = vmatmul.mubr.bf16.gmra.mxu0 %v2653
    %v3325 = vpop.f32.mrf.mxu0
    %v3326 = vadd.f32 %v3286, %v3325
    %v3327 = vpop.f32.mrf.mxu0
    %v3328 = vpop.f32.mrf.mxu0
    %v3329 = vpop.f32.mrf.mxu0
    %3330 = vdwg.mxu0
    %v3331 = vld [vmem:[%s9] sm:$0x1]
    %v3333 = vlaneseq
    %v3334 = vshrl.u32 %v3333, 7
    %v3335 = vsub.s32 0, %v3334
    %v3336 = vrot.slane %v3331, %v3335
    %v3338 = vadd.f32 %v3326, %v3336
    %3339 = vadd.xlane.f32.xlu0 %v3338
    %v3340 = vpop.xlane.xlu0 %3339
    %v3341 = vsub.f32 %v3340, %v3338
    %v3342 = vmul.f32 %v3341, 0.125
    %v3343 = vsub.f32 %v3338, %v3342
    %3345 = vset.pattern.permute.xlu0 8
    %3346 = vperm.xlu0 %3345, %v3343
    %v3347 = vpop.permute.xlu0 %3346
    %v3349 = vadd.f32 %v3338, %v3347
    %3350 = vst [vmem:[#allocation14] sm:$0xff] %v3349
    // Predicated region
    $region70: #{tpu_custom_call.1} parent=1 // pred_check
      _
    $region71: #{tpu_custom_call.1} parent=1 // pred_check_branch
      %3352 = sbr.rel (0) target = $region73
    $region72: #{tpu_custom_call.1} parent=1 // pred_region
      %s3354 = ssub.s32 128, 128
      %3355 = vsyncadd [#allocation4], %s3354
      %s3357 = sshll.u32 [#allocation14], 4
      %s3358 = int_to_ptr.vmem [resolvable:$true] %s3357
      %3360 = dma.vmem_to_hbm [thread:$0]  %s3358, 128, %s10, [#allocation4]
    $region73: #{tpu_custom_call.1} parent=1 // pred_fallthru
      _
    // Predicated region
    $region74: #{tpu_custom_call.1} parent=1 // pred_check
      _
    $region75: #{tpu_custom_call.1} parent=1 // pred_check_branch
      %3362 = sbr.rel (0) target = $region77
    $region76: #{tpu_custom_call.1} parent=1 // pred_region
      %3363 = dma.done [#allocation4], 128
    $region77: #{tpu_custom_call.1} parent=1 // pred_fallthru
      _
    %3364 = vsyncpa [#allocation3], 1
    %3365 = vsyncpa [#allocation6], 1
    %3366 = vsyncpa [#allocation9], 1
    %3367 = vsyncpa [#allocation12], 1
    %3368 = vsyncpa [#allocation4], 1

</llo_original>
